<compile_context>
chip_gen: v6e
topology: v6e:2x2x1
jax: 0.10.0
libtpu: 0.0.40
codegen_flags: <defaults>
</compile_context>

<pallas_src>
import jax
import jax.numpy as jnp
from jax.experimental import pallas as pl
from jax.experimental.pallas import tpu as pltpu


# ---------------------------------------------------------------------------
# Kernel 1: threshold + mask + linear encoder (one bf16 GEMM per grid step)
# ---------------------------------------------------------------------------
def encode_kernel(fm_ref, img_ref, w_ref, b_ref, rep_ref):
    # fm_ref : (TM, HW)    bf16  row-block of (N*SF*KP) feature maps
    # img_ref: (TM, C*HW)  bf16  matching image rows (image repeated per keypoint,
    #                            exactly as the reference module's .repeat does)
    # w_ref  : (C*HW, R)   bf16  grid-invariant encoder weight
    # b_ref  : (1, R)      f32
    # rep_ref: (TM, R)     f32   R is a multiple of 128 -> unmasked lane-dense stores
    hw = fm_ref.shape[-1]
    chw = img_ref.shape[-1]
    c = chw // hw

    # threshold(): fm -= 0.4 ; sigmoid(10000 * fm).  Computed in f32: exp overflow
    # saturates to the hard step (mask -> 0), matching the reference numerics.
    fm = fm_ref[...].astype(jnp.float32)
    mask = 1.0 / (1.0 + jnp.exp(-10000.0 * (fm - 0.4)))          # (TM, HW)

    # Broadcast the mask across channels by lane-aligned tiling (HW % 128 == 0),
    # mask the image, and feed a single K = C*HW contraction to the MXU in bf16.
    mask_c = jnp.concatenate([mask] * c, axis=-1)                 # (TM, C*HW)
    masked = (mask_c * img_ref[...].astype(jnp.float32)).astype(jnp.bfloat16)

    acc = jnp.dot(masked, w_ref[...], preferred_element_type=jnp.float32)  # (TM, R)
    rep_ref[...] = (acc + b_ref[...]).astype(rep_ref.dtype)


def _choose_block_rows(m, cap=512):
    """Largest multiple-of-8 divisor of m (<= cap); prefer >= 2 grid steps (v7x megacore)."""
    divs = [d for d in range(1, m + 1) if m % d == 0]
    cands = [d for d in divs if d % 8 == 0 and d <= cap]
    if not cands:
        return m                      # tiny problem: single full-row block
    tm = max(cands)
    if tm == m:
        smaller = [d for d in cands if d < m]
        if smaller:
            tm = max(smaller)         # keep >= 2 grid steps so both TCs get work
    return tm


def encode_patches(fm2d, img2d, w2d, b_enc):
    # fm2d : (M, HW) bf16, img2d: (M, C*HW) bf16, w2d: (C*HW, R) bf16, b_enc: (1, R) f32
    m_rows, hw = fm2d.shape
    chw, r = w2d.shape
    tm = _choose_block_rows(m_rows)
    grid = (m_rows // tm,)
    return pl.pallas_call(
        encode_kernel,
        out_shape=jax.ShapeDtypeStruct((m_rows, r), jnp.float32),
        grid_spec=pltpu.PrefetchScalarGridSpec(
            num_scalar_prefetch=0,
            grid=grid,
            in_specs=[
                pl.BlockSpec((tm, hw), lambda i: (i, 0)),
                pl.BlockSpec((tm, chw), lambda i: (i, 0)),
                # Grid-invariant weight: at production sizes (large C*HW*R) tile the
                # contraction or cap its buffering to stay inside v7x's 64 MiB VMEM.
                pl.BlockSpec((chw, r), lambda i: (0, 0)),
                pl.BlockSpec((1, r), lambda i: (0, 0)),
            ],
            out_specs=pl.BlockSpec((tm, r), lambda i: (i, 0)),
        ),
        compiler_params=pltpu.CompilerParams(
            dimension_semantics=("parallel",),
            # raises v5e's 16 MiB default scoped VMEM; no-op on v6e/v7x defaults
            vmem_limit_bytes=32 * 1024 * 1024),
    )(fm2d, img2d, w2d, b_enc)


# ---------------------------------------------------------------------------
# Kernel 2: matrix contrastive loss, one grid step per ordered frame pair
# ---------------------------------------------------------------------------
def mcl_kernel(pi_ref, pj_ref, ci_ref, cj_ref, ri_ref, rj_ref, out_ref):
    # ci_ref/cj_ref: (N, KP, CP)  zero-padded normalized coords of frames i / j
    # ri_ref/rj_ref: (N, KP, R)   representations of frames i / j
    # out_ref      : (8, 128)     this pair's loss, broadcast into one tile
    del pi_ref, pj_ref                                    # only used by the index maps
    ci = ci_ref[...].astype(jnp.float32)
    cj = cj_ref[...].astype(jnp.float32)
    ri = ri_ref[...].astype(jnp.float32)
    rj = rj_ref[...].astype(jnp.float32)

    # L2-normalize the (coords ++ representation) vectors without materializing a concat.
    inv_i = jax.lax.rsqrt(jnp.sum(ci * ci, -1, keepdims=True)
                          + jnp.sum(ri * ri, -1, keepdims=True) + 1e-8)
    inv_j = jax.lax.rsqrt(jnp.sum(cj * cj, -1, keepdims=True)
                          + jnp.sum(rj * rj, -1, keepdims=True) + 1e-8)
    ci_n, ri_n = ci * inv_i, ri * inv_i
    cj_n, rj_n = cj * inv_j, rj * inv_j

    inv_tau = 10.0                                        # 1 / tau, tau = 0.1
    # Batched (over N) KP x KP cosine-similarity matrix for this frame pair.
    sim = (jnp.einsum('nkd,nqd->nkq', ri_n, rj_n, preferred_element_type=jnp.float32)
           + jnp.einsum('nkc,nqc->nkq', ci_n, cj_n,
                        preferred_element_type=jnp.float32)) * inv_tau      # (N,KP,KP)

    m = jnp.max(sim, axis=-1, keepdims=True)
    lse = jnp.log(jnp.sum(jnp.exp(sim - m), axis=-1, keepdims=True)) + m    # (N,KP,1)
    # Positives = same keypoint across the two frames (diagonal), computed directly.
    pos = (jnp.sum(ri_n * rj_n, -1, keepdims=True)
           + jnp.sum(ci_n * cj_n, -1, keepdims=True)) * inv_tau             # (N,KP,1)

    pair_loss = jnp.mean(lse - pos)
    out_ref[...] = jnp.full(out_ref.shape, pair_loss, dtype=jnp.float32)


def matrix_contrastive_loss(coords_pad, reps):
    # coords_pad: (N, SF, KP, CP) f32 (CP lane-aligned), reps: (N, SF, KP, R) f32
    n, sf, kp, cp = coords_pad.shape
    r = reps.shape[-1]
    if sf < 2:
        raise ValueError("MatrixContrastiveLoss needs at least 2 sampled frames (SF >= 2)")
    pairs = [(i, j) for i in range(sf) for j in range(sf) if i != j]
    num_pairs = len(pairs)
    pair_i = jnp.asarray([p[0] for p in pairs], jnp.int32)
    pair_j = jnp.asarray([p[1] for p in pairs], jnp.int32)

    losses = pl.pallas_call(
        mcl_kernel,
        out_shape=jax.ShapeDtypeStruct((num_pairs, 8, 128), jnp.float32),
        grid_spec=pltpu.PrefetchScalarGridSpec(
            num_scalar_prefetch=2,
            grid=(num_pairs,),
            in_specs=[
                pl.BlockSpec((n, None, kp, cp), lambda p, pi, pj: (0, pi[p], 0, 0)),
                pl.BlockSpec((n, None, kp, cp), lambda p, pi, pj: (0, pj[p], 0, 0)),
                pl.BlockSpec((n, None, kp, r), lambda p, pi, pj: (0, pi[p], 0, 0)),
                pl.BlockSpec((n, None, kp, r), lambda p, pi, pj: (0, pj[p], 0, 0)),
            ],
            out_specs=pl.BlockSpec((None, 8, 128), lambda p, pi, pj: (p, 0, 0)),
        ),
        compiler_params=pltpu.CompilerParams(
            dimension_semantics=("parallel",)),
    )(pair_i, pair_j, coords_pad, coords_pad, reps, reps)

    return jnp.mean(losses[:, 0, 0])


# ---------------------------------------------------------------------------
# Forward pass (glue reshapes in plain JAX, hot paths in Pallas)
# ---------------------------------------------------------------------------
@jax.jit
def patch_contrastive_forward(coords, feature_maps, images, w_enc, b_enc):
    N, SF, KP, _ = coords.shape
    _, _, C, H, W = images.shape
    HW = H * W
    B = N * SF

    # Stage 1 inputs: DMA bf16 (half the HBM bytes), feature maps flattened so the
    # kernel's matmul M dimension is the full N*SF*KP row count.
    fm2d = feature_maps.reshape(B * KP, HW).astype(jnp.bfloat16)
    # Repeat each frame's image once per keypoint (the reference module materializes
    # exactly this repeat); keeps the kernel a pure 2-D fused mask + GEMM.
    img2d = jnp.repeat(images.reshape(B, C * HW).astype(jnp.bfloat16), KP, axis=0)

    reps = encode_patches(fm2d, img2d,
                          w_enc.astype(jnp.bfloat16),
                          b_enc.astype(jnp.float32))                 # (B*KP, R)
    reps = reps.reshape(N, SF, KP, -1)

    # coords[..., 0] /= W ; coords[..., 1] /= H ; zero-pad to 128 lanes (padding does
    # not change norms or dot products) so the MCL kernel sees lane-aligned blocks.
    coords_norm = coords.astype(jnp.float32) / jnp.array([W, H], jnp.float32)
    coords_pad = jnp.pad(coords_norm, ((0, 0), (0, 0), (0, 0), (0, 126)))

    # The reference permutes to (N, KP, SF, D) before its (undefined) MCL; the kernel
    # below contrasts keypoints across frame pairs, which is layout-equivalent here.
    return matrix_contrastive_loss(coords_pad, reps)


if __name__ == "__main__":
    key = jax.random.PRNGKey(0)
    N, SF, KP = 2, 2, 4
    C, H, W = 3, 16, 16
    R = 128            # representation_size; multiple of 128 -> lane-dense encoder stores

    k1, k2, k3, k4 = jax.random.split(key, 4)
    coords = jax.random.uniform(k1, (N, SF, KP, 2), jnp.float32,
                                minval=0.0, maxval=float(W))
    feature_maps = jax.random.uniform(k2, (N, SF, KP, H, W), jnp.float32)
    images = jax.random.normal(k3, (N, SF, C, H, W), jnp.float32)

    # Deterministic synthetic encoder params: linear (C*H*W -> R).
    w_enc = 0.02 * jax.random.normal(k4, (C * H * W, R), jnp.float32)
    b_enc = jnp.zeros((1, R), jnp.float32)

    loss = patch_contrastive_forward(coords, feature_maps, images, w_enc, b_enc)
    loss = jax.block_until_ready(loss)
    assert jnp.isfinite(loss)
    print("KERNEL_OK")
</pallas_src>

<mosaic_0001>
module attributes {stable_mosaic.version = 11 : i64} {
  func.func @mcl_kernel(%arg0: i32, %arg1: memref<2xi32, #tpu.memory_space<smem>>, %arg2: memref<2xi32, #tpu.memory_space<smem>>, %arg3: memref<2x1x4x128xf32, #tpu.memory_space<vmem>>, %arg4: memref<2x1x4x128xf32, #tpu.memory_space<vmem>>, %arg5: memref<2x1x4x128xf32, #tpu.memory_space<vmem>>, %arg6: memref<2x1x4x128xf32, #tpu.memory_space<vmem>>, %arg7: memref<1x8x128xf32, #tpu.memory_space<vmem>>) attributes {dimension_semantics = [#tpu.dimension_semantics<parallel>], iteration_bounds = array<i64: 2>, scalar_prefetch = 2 : i64, scratch_operands = 0 : i64, tpu.core_type = #tpu.core_type<tc>, window_params = [{transform_indices = @transform_0, window_bounds = array<i64: 2, 1, 4, 128>}, {transform_indices = @transform_1, window_bounds = array<i64: 2, 1, 4, 128>}, {transform_indices = @transform_2, window_bounds = array<i64: 2, 1, 4, 128>}, {transform_indices = @transform_3, window_bounds = array<i64: 2, 1, 4, 128>}, {transform_indices = @transform_4, window_bounds = array<i64: 1, 8, 128>}]} {
    %c0 = arith.constant 0 : index
    %c0_0 = arith.constant 0 : index
    %c0_1 = arith.constant 0 : index
    %c0_2 = arith.constant 0 : index
    %0 = vector.load %arg3[%c0, %c0_0, %c0_1, %c0_2] : memref<2x1x4x128xf32, #tpu.memory_space<vmem>>, vector<2x1x4x128xf32>
    %1 = vector.shape_cast %0 : vector<2x1x4x128xf32> to vector<2x4x128xf32>
    %c0_3 = arith.constant 0 : index
    %c0_4 = arith.constant 0 : index
    %c0_5 = arith.constant 0 : index
    %c0_6 = arith.constant 0 : index
    %2 = vector.load %arg4[%c0_3, %c0_4, %c0_5, %c0_6] : memref<2x1x4x128xf32, #tpu.memory_space<vmem>>, vector<2x1x4x128xf32>
    %3 = vector.shape_cast %2 : vector<2x1x4x128xf32> to vector<2x4x128xf32>
    %c0_7 = arith.constant 0 : index
    %c0_8 = arith.constant 0 : index
    %c0_9 = arith.constant 0 : index
    %c0_10 = arith.constant 0 : index
    %4 = vector.load %arg5[%c0_7, %c0_8, %c0_9, %c0_10] : memref<2x1x4x128xf32, #tpu.memory_space<vmem>>, vector<2x1x4x128xf32>
    %5 = vector.shape_cast %4 : vector<2x1x4x128xf32> to vector<2x4x128xf32>
    %c0_11 = arith.constant 0 : index
    %c0_12 = arith.constant 0 : index
    %c0_13 = arith.constant 0 : index
    %c0_14 = arith.constant 0 : index
    %6 = vector.load %arg6[%c0_11, %c0_12, %c0_13, %c0_14] : memref<2x1x4x128xf32, #tpu.memory_space<vmem>>, vector<2x1x4x128xf32>
    %7 = vector.shape_cast %6 : vector<2x1x4x128xf32> to vector<2x4x128xf32>
    %8 = arith.mulf %1, %1 : vector<2x4x128xf32>
    %cst = arith.constant dense<0.000000e+00> : vector<2x4xf32>
    %9 = vector.multi_reduction <add>, %8, %cst [2] : vector<2x4x128xf32> to vector<2x4xf32>
    %10 = vector.shape_cast %9 : vector<2x4xf32> to vector<2x4x1xf32>
    %11 = arith.mulf %5, %5 : vector<2x4x128xf32>
    %cst_15 = arith.constant dense<0.000000e+00> : vector<2x4xf32>
    %12 = vector.multi_reduction <add>, %11, %cst_15 [2] : vector<2x4x128xf32> to vector<2x4xf32>
    %13 = vector.shape_cast %12 : vector<2x4xf32> to vector<2x4x1xf32>
    %14 = arith.addf %10, %13 : vector<2x4x1xf32>
    %cst_16 = arith.constant 9.99999993E-9 : f32
    %15 = vector.broadcast %cst_16 : f32 to vector<2x4x1xf32>
    %16 = arith.addf %14, %15 : vector<2x4x1xf32>
    %17 = math.rsqrt %16 : vector<2x4x1xf32>
    %18 = arith.mulf %3, %3 : vector<2x4x128xf32>
    %cst_17 = arith.constant dense<0.000000e+00> : vector<2x4xf32>
    %19 = vector.multi_reduction <add>, %18, %cst_17 [2] : vector<2x4x128xf32> to vector<2x4xf32>
    %20 = vector.shape_cast %19 : vector<2x4xf32> to vector<2x4x1xf32>
    %21 = arith.mulf %7, %7 : vector<2x4x128xf32>
    %cst_18 = arith.constant dense<0.000000e+00> : vector<2x4xf32>
    %22 = vector.multi_reduction <add>, %21, %cst_18 [2] : vector<2x4x128xf32> to vector<2x4xf32>
    %23 = vector.shape_cast %22 : vector<2x4xf32> to vector<2x4x1xf32>
    %24 = arith.addf %20, %23 : vector<2x4x1xf32>
    %cst_19 = arith.constant 9.99999993E-9 : f32
    %25 = vector.broadcast %cst_19 : f32 to vector<2x4x1xf32>
    %26 = arith.addf %24, %25 : vector<2x4x1xf32>
    %27 = math.rsqrt %26 : vector<2x4x1xf32>
    %28 = vector.broadcast %17 : vector<2x4x1xf32> to vector<2x4x128xf32>
    %29 = arith.mulf %1, %28 : vector<2x4x128xf32>
    %30 = vector.broadcast %17 : vector<2x4x1xf32> to vector<2x4x128xf32>
    %31 = arith.mulf %5, %30 : vector<2x4x128xf32>
    %32 = vector.broadcast %27 : vector<2x4x1xf32> to vector<2x4x128xf32>
    %33 = arith.mulf %3, %32 : vector<2x4x128xf32>
    %34 = vector.broadcast %27 : vector<2x4x1xf32> to vector<2x4x128xf32>
    %35 = arith.mulf %7, %34 : vector<2x4x128xf32>
    "tpu.trace_start"() <{level = 10 : i32, message = "nkd,nqd->nkq"}> : () -> ()
    %cst_20 = arith.constant dense<0.000000e+00> : vector<2x4x4xf32>
    %36 = tpu.matmul %31, %35, %cst_20 {dimension_numbers = #tpu.dot_dimension_numbers<[2], [2], [1], [1], [0, 0, 0, 1, 1, 1], [0], [0]>} : vector<2x4x128xf32>, vector<2x4x128xf32>, vector<2x4x4xf32> -> vector<2x4x4xf32>
    "tpu.trace_stop"() : () -> ()
    "tpu.trace_start"() <{level = 10 : i32, message = "nkc,nqc->nkq"}> : () -> ()
    %cst_21 = arith.constant dense<0.000000e+00> : vector<2x4x4xf32>
    %37 = tpu.matmul %29, %33, %cst_21 {dimension_numbers = #tpu.dot_dimension_numbers<[2], [2], [1], [1], [0, 0, 0, 1, 1, 1], [0], [0]>} : vector<2x4x128xf32>, vector<2x4x128xf32>, vector<2x4x4xf32> -> vector<2x4x4xf32>
    "tpu.trace_stop"() : () -> ()
    %38 = arith.addf %36, %37 : vector<2x4x4xf32>
    %cst_22 = arith.constant 1.000000e+01 : f32
    %39 = vector.broadcast %cst_22 : f32 to vector<2x4x4xf32>
    %40 = arith.mulf %38, %39 : vector<2x4x4xf32>
    %cst_23 = arith.constant dense<0xFF800000> : vector<2x4xf32>
    %41 = vector.multi_reduction <maximumf>, %40, %cst_23 [2] : vector<2x4x4xf32> to vector<2x4xf32>
    %42 = vector.shape_cast %41 : vector<2x4xf32> to vector<2x4x1xf32>
    %43 = vector.broadcast %42 : vector<2x4x1xf32> to vector<2x4x4xf32>
    %44 = arith.subf %40, %43 : vector<2x4x4xf32>
    %45 = math.exp %44 : vector<2x4x4xf32>
    %cst_24 = arith.constant dense<0.000000e+00> : vector<2x4xf32>
    %46 = vector.multi_reduction <add>, %45, %cst_24 [2] : vector<2x4x4xf32> to vector<2x4xf32>
    %47 = vector.shape_cast %46 : vector<2x4xf32> to vector<2x4x1xf32>
    %48 = math.log %47 : vector<2x4x1xf32>
    %49 = arith.addf %48, %42 : vector<2x4x1xf32>
    %50 = arith.mulf %31, %35 : vector<2x4x128xf32>
    %cst_25 = arith.constant dense<0.000000e+00> : vector<2x4xf32>
    %51 = vector.multi_reduction <add>, %50, %cst_25 [2] : vector<2x4x128xf32> to vector<2x4xf32>
    %52 = vector.shape_cast %51 : vector<2x4xf32> to vector<2x4x1xf32>
    %53 = arith.mulf %29, %33 : vector<2x4x128xf32>
    %cst_26 = arith.constant dense<0.000000e+00> : vector<2x4xf32>
    %54 = vector.multi_reduction <add>, %53, %cst_26 [2] : vector<2x4x128xf32> to vector<2x4xf32>
    %55 = vector.shape_cast %54 : vector<2x4xf32> to vector<2x4x1xf32>
    %56 = arith.addf %52, %55 : vector<2x4x1xf32>
    %cst_27 = arith.constant 1.000000e+01 : f32
    %57 = vector.broadcast %cst_27 : f32 to vector<2x4x1xf32>
    %58 = arith.mulf %56, %57 : vector<2x4x1xf32>
    %59 = arith.subf %49, %58 : vector<2x4x1xf32>
    %60 = vector.shape_cast %59 : vector<2x4x1xf32> to vector<1x2x4x1xf32>
    %cst_28 = arith.constant dense<0.000000e+00> : vector<1xf32>
    %61 = vector.multi_reduction <add>, %60, %cst_28 [1, 2, 3] : vector<1x2x4x1xf32> to vector<1xf32>
    %62 = vector.shape_cast %61 : vector<1xf32> to vector<1x1x1x1xf32>
    %63 = vector.extract %62[0, 0, 0, 0] : f32 from vector<1x1x1x1xf32>
    %cst_29 = arith.constant 8.000000e+00 : f32
    %64 = arith.divf %63, %cst_29 : f32
    %65 = vector.broadcast %64 : f32 to vector<8x128xf32>
    %c0_30 = arith.constant 0 : index
    %c0_31 = arith.constant 0 : index
    %c0_32 = arith.constant 0 : index
    %66 = vector.load %arg7[%c0_30, %c0_31, %c0_32] : memref<1x8x128xf32, #tpu.memory_space<vmem>>, vector<1x8x128xf32>
    %67 = vector.shape_cast %66 : vector<1x8x128xf32> to vector<8x128xf32>
    %68 = vector.shape_cast %65 : vector<8x128xf32> to vector<1x8x128xf32>
    tpu.vector_store %arg7[%c0_30, %c0_31, %c0_32], %68 {strides = array<i32>} : memref<1x8x128xf32, #tpu.memory_space<vmem>>, vector<1x8x128xf32>,
    return
  }
  func.func @transform_0(%arg0: i32, %arg1: memref<2xi32, #tpu.memory_space<smem>>, %arg2: memref<2xi32, #tpu.memory_space<smem>>) -> (i32, i32, i32, i32) {
    %0 = arith.index_cast %arg0 : i32 to index
    %1 = memref.load %arg1[%0] : memref<2xi32, #tpu.memory_space<smem>>
    %c0_i32 = arith.constant 0 : i32
    %c0_i32_0 = arith.constant 0 : i32
    %c0_i32_1 = arith.constant 0 : i32
    %c0_i32_2 = arith.constant 0 : i32
    return %c0_i32, %1, %c0_i32_0, %c0_i32_1 : i32, i32, i32, i32
  }
  func.func @transform_1(%arg0: i32, %arg1: memref<2xi32, #tpu.memory_space<smem>>, %arg2: memref<2xi32, #tpu.memory_space<smem>>) -> (i32, i32, i32, i32) {
    %0 = arith.index_cast %arg0 : i32 to index
    %1 = memref.load %arg2[%0] : memref<2xi32, #tpu.memory_space<smem>>
    %c0_i32 = arith.constant 0 : i32
    %c0_i32_0 = arith.constant 0 : i32
    %c0_i32_1 = arith.constant 0 : i32
    %c0_i32_2 = arith.constant 0 : i32
    return %c0_i32, %1, %c0_i32_0, %c0_i32_1 : i32, i32, i32, i32
  }
  func.func @transform_2(%arg0: i32, %arg1: memref<2xi32, #tpu.memory_space<smem>>, %arg2: memref<2xi32, #tpu.memory_space<smem>>) -> (i32, i32, i32, i32) {
    %0 = arith.index_cast %arg0 : i32 to index
    %1 = memref.load %arg1[%0] : memref<2xi32, #tpu.memory_space<smem>>
    %c0_i32 = arith.constant 0 : i32
    %c0_i32_0 = arith.constant 0 : i32
    %c0_i32_1 = arith.constant 0 : i32
    %c0_i32_2 = arith.constant 0 : i32
    return %c0_i32, %1, %c0_i32_0, %c0_i32_1 : i32, i32, i32, i32
  }
  func.func @transform_3(%arg0: i32, %arg1: memref<2xi32, #tpu.memory_space<smem>>, %arg2: memref<2xi32, #tpu.memory_space<smem>>) -> (i32, i32, i32, i32) {
    %0 = arith.index_cast %arg0 : i32 to index
    %1 = memref.load %arg2[%0] : memref<2xi32, #tpu.memory_space<smem>>
    %c0_i32 = arith.constant 0 : i32
    %c0_i32_0 = arith.constant 0 : i32
    %c0_i32_1 = arith.constant 0 : i32
    %c0_i32_2 = arith.constant 0 : i32
    return %c0_i32, %1, %c0_i32_0, %c0_i32_1 : i32, i32, i32, i32
  }
  func.func @transform_4(%arg0: i32, %arg1: memref<2xi32, #tpu.memory_space<smem>>, %arg2: memref<2xi32, #tpu.memory_space<smem>>) -> (i32, i32, i32) {
    %c0_i32 = arith.constant 0 : i32
    %c0_i32_0 = arith.constant 0 : i32
    %c0_i32_1 = arith.constant 0 : i32
    return %arg0, %c0_i32, %c0_i32_0 : i32, i32, i32
  }
}

module attributes {stable_mosaic.version = 11 : i64} {
  func.func @encode_kernel(%arg0: i32, %arg1: memref<8x256xbf16, #tpu.memory_space<vmem>>, %arg2: memref<8x768xbf16, #tpu.memory_space<vmem>>, %arg3: memref<768x128xbf16, #tpu.memory_space<vmem>>, %arg4: memref<1x128xf32, #tpu.memory_space<vmem>>, %arg5: memref<8x128xf32, #tpu.memory_space<vmem>>) attributes {dimension_semantics = [#tpu.dimension_semantics<parallel>], iteration_bounds = array<i64: 2>, scalar_prefetch = 0 : i64, scratch_operands = 0 : i64, tpu.core_type = #tpu.core_type<tc>, window_params = [{transform_indices = @transform_0, window_bounds = array<i64: 8, 256>}, {transform_indices = @transform_1, window_bounds = array<i64: 8, 768>}, {pipeline_mode = #tpu.pipeline_mode<synchronous>, transform_indices = @transform_2, window_bounds = array<i64: 768, 128>}, {pipeline_mode = #tpu.pipeline_mode<synchronous>, transform_indices = @transform_3, window_bounds = array<i64: 1, 128>}, {transform_indices = @transform_4, window_bounds = array<i64: 8, 128>}]} {
    %c0 = arith.constant 0 : index
    %c0_0 = arith.constant 0 : index
    %0 = vector.load %arg1[%c0, %c0_0] : memref<8x256xbf16, #tpu.memory_space<vmem>>, vector<8x256xbf16>
    %1 = arith.extf %0 : vector<8x256xbf16> to vector<8x256xf32>
    %cst = arith.constant 4.000000e-01 : f32
    %2 = vector.broadcast %cst : f32 to vector<8x256xf32>
    %3 = arith.subf %1, %2 : vector<8x256xf32>
    %cst_1 = arith.constant -1.000000e+04 : f32
    %4 = vector.broadcast %cst_1 : f32 to vector<8x256xf32>
    %5 = arith.mulf %4, %3 : vector<8x256xf32>
    %6 = math.exp %5 : vector<8x256xf32>
    %cst_2 = arith.constant 1.000000e+00 : f32
    %7 = vector.broadcast %cst_2 : f32 to vector<8x256xf32>
    %8 = arith.addf %7, %6 : vector<8x256xf32>
    %cst_3 = arith.constant 1.000000e+00 : f32
    %9 = vector.broadcast %cst_3 : f32 to vector<8x256xf32>
    %10 = arith.divf %9, %8 : vector<8x256xf32>
    %11 = tpu.concatenate %10, %10, %10 in 1 : vector<8x256xf32>, vector<8x256xf32>, vector<8x256xf32> -> vector<8x768xf32>
    %c0_4 = arith.constant 0 : index
    %c0_5 = arith.constant 0 : index
    %12 = vector.load %arg2[%c0_4, %c0_5] : memref<8x768xbf16, #tpu.memory_space<vmem>>, vector<8x768xbf16>
    %13 = arith.extf %12 : vector<8x768xbf16> to vector<8x768xf32>
    %14 = arith.mulf %11, %13 : vector<8x768xf32>
    %15 = arith.truncf %14 : vector<8x768xf32> to vector<8x768xbf16>
    %c0_6 = arith.constant 0 : index
    %c0_7 = arith.constant 0 : index
    %16 = vector.load %arg3[%c0_6, %c0_7] : memref<768x128xbf16, #tpu.memory_space<vmem>>, vector<768x128xbf16>
    %cst_8 = arith.constant dense<0.000000e+00> : vector<8x128xf32>
    %17 = tpu.matmul %15, %16, %cst_8 {dimension_numbers = #tpu.dot_dimension_numbers<[1], [0], [0], [1], [0, 0, 1, 1], [], []>} : vector<8x768xbf16>, vector<768x128xbf16>, vector<8x128xf32> -> vector<8x128xf32>
    %c0_9 = arith.constant 0 : index
    %c0_10 = arith.constant 0 : index
    %18 = vector.load %arg4[%c0_9, %c0_10] : memref<1x128xf32, #tpu.memory_space<vmem>>, vector<1x128xf32>
    %19 = vector.broadcast %18 : vector<1x128xf32> to vector<8x128xf32>
    %20 = arith.addf %17, %19 : vector<8x128xf32>
    %c0_11 = arith.constant 0 : index
    %c0_12 = arith.constant 0 : index
    %21 = vector.load %arg5[%c0_11, %c0_12] : memref<8x128xf32, #tpu.memory_space<vmem>>, vector<8x128xf32>
    tpu.vector_store %arg5[%c0_11, %c0_12], %20 {strides = array<i32>} : memref<8x128xf32, #tpu.memory_space<vmem>>, vector<8x128xf32>,
    return
  }
  func.func @transform_0(%arg0: i32) -> (i32, i32) {
    %c0_i32 = arith.constant 0 : i32
    %c0_i32_0 = arith.constant 0 : i32
    return %arg0, %c0_i32 : i32, i32
  }
  func.func @transform_1(%arg0: i32) -> (i32, i32) {
    %c0_i32 = arith.constant 0 : i32
    %c0_i32_0 = arith.constant 0 : i32
    return %arg0, %c0_i32 : i32, i32
  }
  func.func @transform_2(%arg0: i32) -> (i32, i32) {
    %c0_i32 = arith.constant 0 : i32
    %c0_i32_0 = arith.constant 0 : i32
    %c0_i32_1 = arith.constant 0 : i32
    return %c0_i32, %c0_i32_0 : i32, i32
  }
  func.func @transform_3(%arg0: i32) -> (i32, i32) {
    %c0_i32 = arith.constant 0 : i32
    %c0_i32_0 = arith.constant 0 : i32
    %c0_i32_1 = arith.constant 0 : i32
    return %c0_i32, %c0_i32_0 : i32, i32
  }
  func.func @transform_4(%arg0: i32) -> (i32, i32) {
    %c0_i32 = arith.constant 0 : i32
    %c0_i32_0 = arith.constant 0 : i32
    return %arg0, %c0_i32 : i32, i32
  }
}

</mosaic_0001>

<llo_original>
// kernel: patch_contrastive_forward.3
$region0: #{patch_contrastive_forward.3}
  #allocation0 [shape = 'u32[]', space=smem, size = 0x4, offset = 0x4, fixed_abs, tag = 'smem constant byte address 0x4 - core index']
  #allocation1 [shape = 'u32[144,128]{1,0:T(1,128)}', space=vmem, size = 0x12000, scoped, tag = 'internal scratch']
  #allocation2 [shape = 's32[1]{0}', space=sflag, size = 0x4, scoped, tag = 'scoped memory for patch_contrastive_forward.3']
  #allocation3 [shape = 'u8[512]{0}', space=smem, size = 0x200, scoped, tag = 'prefetched SMEM operand 0']
  #allocation4 [shape = 'u8[512]{0}', space=smem, size = 0x200, scoped, tag = 'prefetched SMEM operand 1']
  %s0 = inlined_call_operand.vmem [shape: s32[2], index: 0, kind: input, shape index: {}]
  %s1 = inlined_call_operand.vmem [shape: s32[2], index: 1, kind: input, shape index: {}]
  %s2 = inlined_call_operand.vmem [shape: f32[2,2,4,128], index: 2, kind: input, shape index: {}, may-alias: {2,3}]
  %s3 = inlined_call_operand.vmem [shape: f32[2,2,4,128], index: 3, kind: input, shape index: {}, may-alias: {2,3}]
  %s4 = inlined_call_operand.vmem [shape: f32[2,2,4,128], index: 4, kind: input, shape index: {}, may-alias: {4,5}]
  %s5 = inlined_call_operand.vmem [shape: f32[2,2,4,128], index: 5, kind: input, shape index: {}, may-alias: {4,5}]
  %s6 = inlined_call_operand.vmem [shape: f32[2,8,128], index: 6, kind: output, shape index: {}]
  %s7 = sld [smem:[#allocation0]]
  $region213: #{patch_contrastive_forward.3} parent=0
    _
  %s9 = ssub.s32 1, %s7
  %s10 = scalar_select 0, %s9, %s7
  %s11 = sshll.u32 %s0, 4
  %s12 = int_to_ptr.vmem [resolvable:$true] %s11
  %14 = dma.vmem_to_smem %s12, 16, [#allocation3], [#allocation2]
  %s15 = sshll.u32 %s1, 4
  %s16 = int_to_ptr.vmem [resolvable:$true] %s15
  %18 = dma.vmem_to_smem %s16, 16, [#allocation4], [#allocation2]
  %19 = dma.done [#allocation2], 32
  %20 = sfence
  $region1: #{patch_contrastive_forward.3} parent=0
    #allocation5 [shape = 'u8[8192]{0}', space=vmem, size = 0x2000, scoped, tag = 'input window, operand 2']
    #allocation6 [shape = 'u8[8192]{0}', space=vmem, size = 0x2000, scoped, tag = 'input window, operand 3']
    #allocation7 [shape = 'u8[8192]{0}', space=vmem, size = 0x2000, scoped, tag = 'input window, operand 4']
    #allocation8 [shape = 'u8[8192]{0}', space=vmem, size = 0x2000, scoped, tag = 'input window, operand 5']
    loop: start=0, step=1, limit=4
    $region2: #{patch_contrastive_forward.3} parent=1 // loop_pre_header
      _
    $region3: #{patch_contrastive_forward.3} parent=1 // loop_header
      %s22 = sphi 0, %s26
      %p23 = scmp.ge.s32.totalorder %s22, 4
      %s34 = sphi 0, %s36
      %s37 = sphi 0, %s34
      %s38 = sphi 0, %s37
      %s54 = sphi 0, %s38
      %s62 = sphi 0, %s64
      %s65 = sphi 0, %s62
      %s66 = sphi 0, %s65
      %s82 = sphi 0, %s66
      %s90 = sphi 0, %s92
      %s93 = sphi 0, %s90
      %s94 = sphi 0, %s93
      %s110 = sphi 0, %s94
      %s118 = sphi 0, %s120
      %s121 = sphi 0, %s118
      %s122 = sphi 0, %s121
      %s138 = sphi 0, %s122
      %s144 = sphi 0, %s146
      %s147 = sphi 0, %s144
      %s148 = sphi 0, %s147
      %s164 = sphi 0, %s148
    $region4: #{patch_contrastive_forward.3} parent=1 // loop_header_branch
      %25 = sbr.rel (%p23) target = $region8
    $region5: #{patch_contrastive_forward.3} parent=1 // loop_body
      %s27 = ssub.s32 %s22, 1
      %s28 = ssub.s32 %s22, 2
      %s29 = sadd.s32 %s22, 1
      %s30 = sld [smem:[#allocation3 + %s22]]
      %s31 = sld [smem:[#allocation3 + %s29]]
      %s32 = ssub.s32 %s30, %s31
      %p33 = scmp.eq.s32.totalorder %s32, 0
      %s35 = sadd.s32 %s34, 1
      %s36 = scalar_select %p33, %s34, %s35
      %p39 = pneg %p33
      %p40 = scmp.eq.s32.totalorder %s22, 1
      %p41 = por %p39, %p40
      %p42 = scmp.ne.s32.totalorder %s34, %s37
      %p43 = scmp.eq.s32.totalorder %s22, 0
      %p44 = por %p42, %p43
      %p45 = scmp.ne.s32.totalorder %s34, %s37
      %p46 = scmp.eq.s32.totalorder %s27, 1
      %p47 = por %p45, %p46
      %p48 = scmp.ne.s32.totalorder %s37, %s38
      %p49 = scmp.eq.s32.totalorder %s27, 0
      %p50 = por %p48, %p49
      %p51 = scmp.ne.s32.totalorder %s37, %s38
      %p52 = scmp.eq.s32.totalorder %s28, 1
      %p53 = por %p51, %p52
      %p55 = scmp.ne.s32.totalorder %s38, %s54
      %p56 = scmp.eq.s32.totalorder %s28, 0
      %p57 = por %p55, %p56
      %s58 = sld [smem:[#allocation4 + %s22]]
      %s59 = sld [smem:[#allocation4 + %s29]]
      %s60 = ssub.s32 %s58, %s59
      %p61 = scmp.eq.s32.totalorder %s60, 0
      %s63 = sadd.s32 %s62, 1
      %s64 = scalar_select %p61, %s62, %s63
      %p67 = pneg %p61
      %p68 = scmp.eq.s32.totalorder %s22, 1
      %p69 = por %p67, %p68
      %p70 = scmp.ne.s32.totalorder %s62, %s65
      %p71 = scmp.eq.s32.totalorder %s22, 0
      %p72 = por %p70, %p71
      %p73 = scmp.ne.s32.totalorder %s62, %s65
      %p74 = scmp.eq.s32.totalorder %s27, 1
      %p75 = por %p73, %p74
      %p76 = scmp.ne.s32.totalorder %s65, %s66
      %p77 = scmp.eq.s32.totalorder %s27, 0
      %p78 = por %p76, %p77
      %p79 = scmp.ne.s32.totalorder %s65, %s66
      %p80 = scmp.eq.s32.totalorder %s28, 1
      %p81 = por %p79, %p80
      %p83 = scmp.ne.s32.totalorder %s66, %s82
      %p84 = scmp.eq.s32.totalorder %s28, 0
      %p85 = por %p83, %p84
      %s86 = sld [smem:[#allocation3 + %s22]]
      %s87 = sld [smem:[#allocation3 + %s29]]
      %s88 = ssub.s32 %s86, %s87
      %p89 = scmp.eq.s32.totalorder %s88, 0
      %s91 = sadd.s32 %s90, 1
      %s92 = scalar_select %p89, %s90, %s91
      %p95 = pneg %p89
      %p96 = scmp.eq.s32.totalorder %s22, 1
      %p97 = por %p95, %p96
      %p98 = scmp.ne.s32.totalorder %s90, %s93
      %p99 = scmp.eq.s32.totalorder %s22, 0
      %p100 = por %p98, %p99
      %p101 = scmp.ne.s32.totalorder %s90, %s93
      %p102 = scmp.eq.s32.totalorder %s27, 1
      %p103 = por %p101, %p102
      %p104 = scmp.ne.s32.totalorder %s93, %s94
      %p105 = scmp.eq.s32.totalorder %s27, 0
      %p106 = por %p104, %p105
      %p107 = scmp.ne.s32.totalorder %s93, %s94
      %p108 = scmp.eq.s32.totalorder %s28, 1
      %p109 = por %p107, %p108
      %p111 = scmp.ne.s32.totalorder %s94, %s110
      %p112 = scmp.eq.s32.totalorder %s28, 0
      %p113 = por %p111, %p112
      %s114 = sld [smem:[#allocation4 + %s22]]
      %s115 = sld [smem:[#allocation4 + %s29]]
      %s116 = ssub.s32 %s114, %s115
      %p117 = scmp.eq.s32.totalorder %s116, 0
      %s119 = sadd.s32 %s118, 1
      %s120 = scalar_select %p117, %s118, %s119
      %p123 = pneg %p117
      %p124 = scmp.eq.s32.totalorder %s22, 1
      %p125 = por %p123, %p124
      %p126 = scmp.ne.s32.totalorder %s118, %s121
      %p127 = scmp.eq.s32.totalorder %s22, 0
      %p128 = por %p126, %p127
      %p129 = scmp.ne.s32.totalorder %s118, %s121
      %p130 = scmp.eq.s32.totalorder %s27, 1
      %p131 = por %p129, %p130
      %p132 = scmp.ne.s32.totalorder %s121, %s122
      %p133 = scmp.eq.s32.totalorder %s27, 0
      %p134 = por %p132, %p133
      %p135 = scmp.ne.s32.totalorder %s121, %s122
      %p136 = scmp.eq.s32.totalorder %s28, 1
      %p137 = por %p135, %p136
      %p139 = scmp.ne.s32.totalorder %s122, %s138
      %p140 = scmp.eq.s32.totalorder %s28, 0
      %p141 = por %p139, %p140
      %s142 = ssub.s32 %s22, %s29
      %p143 = scmp.eq.s32.totalorder %s142, 0
      %s145 = sadd.s32 %s144, 1
      %s146 = scalar_select %p143, %s144, %s145
      %p149 = pneg %p143
      %p150 = scmp.eq.s32.totalorder %s22, 1
      %p151 = por %p149, %p150
      %p152 = scmp.ne.s32.totalorder %s144, %s147
      %p153 = scmp.eq.s32.totalorder %s22, 0
      %p154 = por %p152, %p153
      %p155 = scmp.ne.s32.totalorder %s144, %s147
      %p156 = scmp.eq.s32.totalorder %s27, 1
      %p157 = por %p155, %p156
      %p158 = scmp.ne.s32.totalorder %s147, %s148
      %p159 = scmp.eq.s32.totalorder %s27, 0
      %p160 = por %p158, %p159
      %p161 = scmp.ne.s32.totalorder %s147, %s148
      %p162 = scmp.eq.s32.totalorder %s28, 1
      %p163 = por %p161, %p162
      %p165 = scmp.ne.s32.totalorder %s148, %s164
      %p166 = scmp.eq.s32.totalorder %s28, 0
      %p167 = por %p165, %p166
      %p168 = scmp.le.s32.totalorder 1, %s22
      %p169 = scmp.lt.s32.totalorder %s22, 3
      %p170 = pnand %p168, %p169
      %p171 = pneg %p170
      // Predicated region
      $region9: #{patch_contrastive_forward.3} parent=5 // pred_check
        _
      $region10: #{patch_contrastive_forward.3} parent=5 // pred_check_branch
        %173 = sbr.rel (%p170) target = $region12
      $region11: #{patch_contrastive_forward.3} parent=5 // pred_region
        %s174 = ssub.s32 %s22, 1
      $region12: #{patch_contrastive_forward.3} parent=5 // pred_fallthru
        _
      %p175 = scmp.lt.s32.totalorder %s22, 2
      // Predicated region
      $region13: #{patch_contrastive_forward.3} parent=5 // pred_check
        %p176 = pneg %p175
      $region14: #{patch_contrastive_forward.3} parent=5 // pred_check_branch
        %178 = sbr.rel (%p176) target = $region16
      $region15: #{patch_contrastive_forward.3} parent=5 // pred_region
        // Predicated region
        $region17: #{patch_contrastive_forward.3} parent=15 // pred_check
          %p179 = pneg %p44
        $region18: #{patch_contrastive_forward.3} parent=15 // pred_check_branch
          %181 = sbr.rel (%p179) target = $region20
        $region19: #{patch_contrastive_forward.3} parent=15 // pred_region
          %s182 = sand.u32 %s34, 1
          %s183 = sand.u32 %s34, 1
          %s184 = smul.addr %s183, 8
          %s185 = scalar_lea.vmem [#allocation5], %s184
          %s186 = sld [smem:[#allocation3 + %s22]]
          %s187 = smul.addr %s186, 4
          %s188 = scalar_lea.vmem %s2, %s187
          // Predicated region
          $region21: #{patch_contrastive_forward.3} parent=19 // pred_check
            _
          $region22: #{patch_contrastive_forward.3} parent=19 // pred_check_branch
            %190 = sbr.rel (0) target = $region24
          $region23: #{patch_contrastive_forward.3} parent=19 // pred_region
            // Predicated region
            $region25: #{patch_contrastive_forward.3} parent=23 // pred_check
              _
            $region26: #{patch_contrastive_forward.3} parent=23 // pred_check_branch
              %192 = sbr.rel target = $region28
            $region27: #{patch_contrastive_forward.3} parent=23 // pred_region
              // Predicated region
              $region40: #{patch_contrastive_forward.3} parent=27 // pred_check
                _
              $region41: #{patch_contrastive_forward.3} parent=27 // pred_check_branch
                %210 = sbr.rel (0) target = $region43
              $region42: #{patch_contrastive_forward.3} parent=27 // pred_region
                loop: start=0, step=1, limit=1
                $region44: #{patch_contrastive_forward.3} parent=42 // loop_pre_header
                  _
                $region45: #{patch_contrastive_forward.3} parent=42 // loop_header
                  %s212 = sphi 0, %s216
                  %p213 = scmp.ge.s32.totalorder %s212, 1
                  %s217 = sphi %s188, %s188
                  %s218 = sphi %s185, %s185
                $region46: #{patch_contrastive_forward.3} parent=42 // loop_header_branch
                  %215 = sbr.rel (%p213) target = $region50
                $region47: #{patch_contrastive_forward.3} parent=42 // loop_body
                  _
                $region48: #{patch_contrastive_forward.3} parent=42 // loop_footer
                  %s216 = sadd.s32 1, %s212
                $region49: #{patch_contrastive_forward.3} parent=42 // loop_footer_branch
                  %211 = sbr.rel target = $region45
                $region50: #{patch_contrastive_forward.3} parent=42 // loop_exit
                  _
                %s220 = ssub.s32 16, 1
                loop: start=0, step=1, limit=1
                $region51: #{patch_contrastive_forward.3} parent=42 // loop_pre_header
                  _
                $region52: #{patch_contrastive_forward.3} parent=42 // loop_header
                  %s222 = sphi 0, %s226
                  %p223 = scmp.ge.s32.totalorder %s222, 1
                  %s227 = sphi %s188, %s188
                  %s228 = sphi %s185, %s185
                $region53: #{patch_contrastive_forward.3} parent=42 // loop_header_branch
                  %225 = sbr.rel (%p223) target = $region57
                $region54: #{patch_contrastive_forward.3} parent=42 // loop_body
                  %v229 = vld [vmem:[%s227] sm:%s220]
                  %230 = vst [vmem:[%s228] sm:%s220] %v229
                  %v231 = vld [vmem:[%s227 + $0x8] sm:%s220]
                  %232 = vst [vmem:[%s228 + $0x4] sm:%s220] %v231
                $region55: #{patch_contrastive_forward.3} parent=42 // loop_footer
                  %s226 = sadd.s32 1, %s222
                $region56: #{patch_contrastive_forward.3} parent=42 // loop_footer_branch
                  %221 = sbr.rel target = $region52
                $region57: #{patch_contrastive_forward.3} parent=42 // loop_exit
                  _
              $region43: #{patch_contrastive_forward.3} parent=27 // pred_fallthru
                _
            $region28: #{patch_contrastive_forward.3} parent=23 // pred_fallthru
              _
            // Predicated region
            $region29: #{patch_contrastive_forward.3} parent=23 // pred_check
              _
            $region30: #{patch_contrastive_forward.3} parent=23 // pred_check_branch
              %194 = sbr.rel (0) target = $region32
            $region31: #{patch_contrastive_forward.3} parent=23 // pred_region
              %s196 = ssub.s32 16, 1
              loop: start=0, step=1, limit=1
              $region33: #{patch_contrastive_forward.3} parent=31 // loop_pre_header
                _
              $region34: #{patch_contrastive_forward.3} parent=31 // loop_header
                %s198 = sphi 0, %s202
                %p199 = scmp.ge.s32.totalorder %s198, 1
                %s203 = sphi %s188, %s188
                %s204 = sphi %s185, %s185
              $region35: #{patch_contrastive_forward.3} parent=31 // loop_header_branch
                %201 = sbr.rel (%p199) target = $region39
              $region36: #{patch_contrastive_forward.3} parent=31 // loop_body
                %v205 = vld [vmem:[%s203] sm:%s196]
                %206 = vst [vmem:[%s204] sm:%s196] %v205
                %v207 = vld [vmem:[%s203 + $0x8] sm:%s196]
                %208 = vst [vmem:[%s204 + $0x4] sm:%s196] %v207
              $region37: #{patch_contrastive_forward.3} parent=31 // loop_footer
                %s202 = sadd.s32 1, %s198
              $region38: #{patch_contrastive_forward.3} parent=31 // loop_footer_branch
                %197 = sbr.rel target = $region34
              $region39: #{patch_contrastive_forward.3} parent=31 // loop_exit
                _
            $region32: #{patch_contrastive_forward.3} parent=23 // pred_fallthru
              _
          $region24: #{patch_contrastive_forward.3} parent=19 // pred_fallthru
            _
          %233 = vnop
        $region20: #{patch_contrastive_forward.3} parent=15 // pred_fallthru
          _
        // Predicated region
        $region58: #{patch_contrastive_forward.3} parent=15 // pred_check
          %p234 = pneg %p72
        $region59: #{patch_contrastive_forward.3} parent=15 // pred_check_branch
          %236 = sbr.rel (%p234) target = $region61
        $region60: #{patch_contrastive_forward.3} parent=15 // pred_region
          %s237 = sand.u32 %s62, 1
          %s238 = sand.u32 %s62, 1
          %s239 = smul.addr %s238, 8
          %s240 = scalar_lea.vmem [#allocation6], %s239
          %s241 = sld [smem:[#allocation4 + %s22]]
          %s242 = smul.addr %s241, 4
          %s243 = scalar_lea.vmem %s3, %s242
          // Predicated region
          $region62: #{patch_contrastive_forward.3} parent=60 // pred_check
            _
          $region63: #{patch_contrastive_forward.3} parent=60 // pred_check_branch
            %245 = sbr.rel (0) target = $region65
          $region64: #{patch_contrastive_forward.3} parent=60 // pred_region
            // Predicated region
            $region66: #{patch_contrastive_forward.3} parent=64 // pred_check
              _
            $region67: #{patch_contrastive_forward.3} parent=64 // pred_check_branch
              %247 = sbr.rel target = $region69
            $region68: #{patch_contrastive_forward.3} parent=64 // pred_region
              // Predicated region
              $region81: #{patch_contrastive_forward.3} parent=68 // pred_check
                _
              $region82: #{patch_contrastive_forward.3} parent=68 // pred_check_branch
                %265 = sbr.rel (0) target = $region84
              $region83: #{patch_contrastive_forward.3} parent=68 // pred_region
                loop: start=0, step=1, limit=1
                $region85: #{patch_contrastive_forward.3} parent=83 // loop_pre_header
                  _
                $region86: #{patch_contrastive_forward.3} parent=83 // loop_header
                  %s267 = sphi 0, %s271
                  %p268 = scmp.ge.s32.totalorder %s267, 1
                  %s272 = sphi %s243, %s243
                  %s273 = sphi %s240, %s240
                $region87: #{patch_contrastive_forward.3} parent=83 // loop_header_branch
                  %270 = sbr.rel (%p268) target = $region91
                $region88: #{patch_contrastive_forward.3} parent=83 // loop_body
                  _
                $region89: #{patch_contrastive_forward.3} parent=83 // loop_footer
                  %s271 = sadd.s32 1, %s267
                $region90: #{patch_contrastive_forward.3} parent=83 // loop_footer_branch
                  %266 = sbr.rel target = $region86
                $region91: #{patch_contrastive_forward.3} parent=83 // loop_exit
                  _
                %s275 = ssub.s32 16, 1
                loop: start=0, step=1, limit=1
                $region92: #{patch_contrastive_forward.3} parent=83 // loop_pre_header
                  _
                $region93: #{patch_contrastive_forward.3} parent=83 // loop_header
                  %s277 = sphi 0, %s281
                  %p278 = scmp.ge.s32.totalorder %s277, 1
                  %s282 = sphi %s243, %s243
                  %s283 = sphi %s240, %s240
                $region94: #{patch_contrastive_forward.3} parent=83 // loop_header_branch
                  %280 = sbr.rel (%p278) target = $region98
                $region95: #{patch_contrastive_forward.3} parent=83 // loop_body
                  %v284 = vld [vmem:[%s282] sm:%s275]
                  %285 = vst [vmem:[%s283] sm:%s275] %v284
                  %v286 = vld [vmem:[%s282 + $0x8] sm:%s275]
                  %287 = vst [vmem:[%s283 + $0x4] sm:%s275] %v286
                $region96: #{patch_contrastive_forward.3} parent=83 // loop_footer
                  %s281 = sadd.s32 1, %s277
                $region97: #{patch_contrastive_forward.3} parent=83 // loop_footer_branch
                  %276 = sbr.rel target = $region93
                $region98: #{patch_contrastive_forward.3} parent=83 // loop_exit
                  _
              $region84: #{patch_contrastive_forward.3} parent=68 // pred_fallthru
                _
            $region69: #{patch_contrastive_forward.3} parent=64 // pred_fallthru
              _
            // Predicated region
            $region70: #{patch_contrastive_forward.3} parent=64 // pred_check
              _
            $region71: #{patch_contrastive_forward.3} parent=64 // pred_check_branch
              %249 = sbr.rel (0) target = $region73
            $region72: #{patch_contrastive_forward.3} parent=64 // pred_region
              %s251 = ssub.s32 16, 1
              loop: start=0, step=1, limit=1
              $region74: #{patch_contrastive_forward.3} parent=72 // loop_pre_header
                _
              $region75: #{patch_contrastive_forward.3} parent=72 // loop_header
                %s253 = sphi 0, %s257
                %p254 = scmp.ge.s32.totalorder %s253, 1
                %s258 = sphi %s243, %s243
                %s259 = sphi %s240, %s240
              $region76: #{patch_contrastive_forward.3} parent=72 // loop_header_branch
                %256 = sbr.rel (%p254) target = $region80
              $region77: #{patch_contrastive_forward.3} parent=72 // loop_body
                %v260 = vld [vmem:[%s258] sm:%s251]
                %261 = vst [vmem:[%s259] sm:%s251] %v260
                %v262 = vld [vmem:[%s258 + $0x8] sm:%s251]
                %263 = vst [vmem:[%s259 + $0x4] sm:%s251] %v262
              $region78: #{patch_contrastive_forward.3} parent=72 // loop_footer
                %s257 = sadd.s32 1, %s253
              $region79: #{patch_contrastive_forward.3} parent=72 // loop_footer_branch
                %252 = sbr.rel target = $region75
              $region80: #{patch_contrastive_forward.3} parent=72 // loop_exit
                _
            $region73: #{patch_contrastive_forward.3} parent=64 // pred_fallthru
              _
          $region65: #{patch_contrastive_forward.3} parent=60 // pred_fallthru
            _
          %288 = vnop
        $region61: #{patch_contrastive_forward.3} parent=15 // pred_fallthru
          _
        // Predicated region
        $region99: #{patch_contrastive_forward.3} parent=15 // pred_check
          %p289 = pneg %p100
        $region100: #{patch_contrastive_forward.3} parent=15 // pred_check_branch
          %291 = sbr.rel (%p289) target = $region102
        $region101: #{patch_contrastive_forward.3} parent=15 // pred_region
          %s292 = sand.u32 %s90, 1
          %s293 = sand.u32 %s90, 1
          %s294 = smul.addr %s293, 8
          %s295 = scalar_lea.vmem [#allocation7], %s294
          %s296 = sld [smem:[#allocation3 + %s22]]
          %s297 = smul.addr %s296, 4
          %s298 = scalar_lea.vmem %s4, %s297
          // Predicated region
          $region103: #{patch_contrastive_forward.3} parent=101 // pred_check
            _
          $region104: #{patch_contrastive_forward.3} parent=101 // pred_check_branch
            %300 = sbr.rel (0) target = $region106
          $region105: #{patch_contrastive_forward.3} parent=101 // pred_region
            // Predicated region
            $region107: #{patch_contrastive_forward.3} parent=105 // pred_check
              _
            $region108: #{patch_contrastive_forward.3} parent=105 // pred_check_branch
              %302 = sbr.rel target = $region110
            $region109: #{patch_contrastive_forward.3} parent=105 // pred_region
              // Predicated region
              $region122: #{patch_contrastive_forward.3} parent=109 // pred_check
                _
              $region123: #{patch_contrastive_forward.3} parent=109 // pred_check_branch
                %320 = sbr.rel (0) target = $region125
              $region124: #{patch_contrastive_forward.3} parent=109 // pred_region
                loop: start=0, step=1, limit=1
                $region126: #{patch_contrastive_forward.3} parent=124 // loop_pre_header
                  _
                $region127: #{patch_contrastive_forward.3} parent=124 // loop_header
                  %s322 = sphi 0, %s326
                  %p323 = scmp.ge.s32.totalorder %s322, 1
                  %s327 = sphi %s298, %s298
                  %s328 = sphi %s295, %s295
                $region128: #{patch_contrastive_forward.3} parent=124 // loop_header_branch
                  %325 = sbr.rel (%p323) target = $region132
                $region129: #{patch_contrastive_forward.3} parent=124 // loop_body
                  _
                $region130: #{patch_contrastive_forward.3} parent=124 // loop_footer
                  %s326 = sadd.s32 1, %s322
                $region131: #{patch_contrastive_forward.3} parent=124 // loop_footer_branch
                  %321 = sbr.rel target = $region127
                $region132: #{patch_contrastive_forward.3} parent=124 // loop_exit
                  _
                %s330 = ssub.s32 16, 1
                loop: start=0, step=1, limit=1
                $region133: #{patch_contrastive_forward.3} parent=124 // loop_pre_header
                  _
                $region134: #{patch_contrastive_forward.3} parent=124 // loop_header
                  %s332 = sphi 0, %s336
                  %p333 = scmp.ge.s32.totalorder %s332, 1
                  %s337 = sphi %s298, %s298
                  %s338 = sphi %s295, %s295
                $region135: #{patch_contrastive_forward.3} parent=124 // loop_header_branch
                  %335 = sbr.rel (%p333) target = $region139
                $region136: #{patch_contrastive_forward.3} parent=124 // loop_body
                  %v339 = vld [vmem:[%s337] sm:%s330]
                  %340 = vst [vmem:[%s338] sm:%s330] %v339
                  %v341 = vld [vmem:[%s337 + $0x8] sm:%s330]
                  %342 = vst [vmem:[%s338 + $0x4] sm:%s330] %v341
                $region137: #{patch_contrastive_forward.3} parent=124 // loop_footer
                  %s336 = sadd.s32 1, %s332
                $region138: #{patch_contrastive_forward.3} parent=124 // loop_footer_branch
                  %331 = sbr.rel target = $region134
                $region139: #{patch_contrastive_forward.3} parent=124 // loop_exit
                  _
              $region125: #{patch_contrastive_forward.3} parent=109 // pred_fallthru
                _
            $region110: #{patch_contrastive_forward.3} parent=105 // pred_fallthru
              _
            // Predicated region
            $region111: #{patch_contrastive_forward.3} parent=105 // pred_check
              _
            $region112: #{patch_contrastive_forward.3} parent=105 // pred_check_branch
              %304 = sbr.rel (0) target = $region114
            $region113: #{patch_contrastive_forward.3} parent=105 // pred_region
              %s306 = ssub.s32 16, 1
              loop: start=0, step=1, limit=1
              $region115: #{patch_contrastive_forward.3} parent=113 // loop_pre_header
                _
              $region116: #{patch_contrastive_forward.3} parent=113 // loop_header
                %s308 = sphi 0, %s312
                %p309 = scmp.ge.s32.totalorder %s308, 1
                %s313 = sphi %s298, %s298
                %s314 = sphi %s295, %s295
              $region117: #{patch_contrastive_forward.3} parent=113 // loop_header_branch
                %311 = sbr.rel (%p309) target = $region121
              $region118: #{patch_contrastive_forward.3} parent=113 // loop_body
                %v315 = vld [vmem:[%s313] sm:%s306]
                %316 = vst [vmem:[%s314] sm:%s306] %v315
                %v317 = vld [vmem:[%s313 + $0x8] sm:%s306]
                %318 = vst [vmem:[%s314 + $0x4] sm:%s306] %v317
              $region119: #{patch_contrastive_forward.3} parent=113 // loop_footer
                %s312 = sadd.s32 1, %s308
              $region120: #{patch_contrastive_forward.3} parent=113 // loop_footer_branch
                %307 = sbr.rel target = $region116
              $region121: #{patch_contrastive_forward.3} parent=113 // loop_exit
                _
            $region114: #{patch_contrastive_forward.3} parent=105 // pred_fallthru
              _
          $region106: #{patch_contrastive_forward.3} parent=101 // pred_fallthru
            _
          %343 = vnop
        $region102: #{patch_contrastive_forward.3} parent=15 // pred_fallthru
          _
        // Predicated region
        $region140: #{patch_contrastive_forward.3} parent=15 // pred_check
          %p344 = pneg %p128
        $region141: #{patch_contrastive_forward.3} parent=15 // pred_check_branch
          %346 = sbr.rel (%p344) target = $region143
        $region142: #{patch_contrastive_forward.3} parent=15 // pred_region
          %s347 = sand.u32 %s118, 1
          %s348 = sand.u32 %s118, 1
          %s349 = smul.addr %s348, 8
          %s350 = scalar_lea.vmem [#allocation8], %s349
          %s351 = sld [smem:[#allocation4 + %s22]]
          %s352 = smul.addr %s351, 4
          %s353 = scalar_lea.vmem %s5, %s352
          // Predicated region
          $region144: #{patch_contrastive_forward.3} parent=142 // pred_check
            _
          $region145: #{patch_contrastive_forward.3} parent=142 // pred_check_branch
            %355 = sbr.rel (0) target = $region147
          $region146: #{patch_contrastive_forward.3} parent=142 // pred_region
            // Predicated region
            $region148: #{patch_contrastive_forward.3} parent=146 // pred_check
              _
            $region149: #{patch_contrastive_forward.3} parent=146 // pred_check_branch
              %357 = sbr.rel target = $region151
            $region150: #{patch_contrastive_forward.3} parent=146 // pred_region
              // Predicated region
              $region163: #{patch_contrastive_forward.3} parent=150 // pred_check
                _
              $region164: #{patch_contrastive_forward.3} parent=150 // pred_check_branch
                %375 = sbr.rel (0) target = $region166
              $region165: #{patch_contrastive_forward.3} parent=150 // pred_region
                loop: start=0, step=1, limit=1
                $region167: #{patch_contrastive_forward.3} parent=165 // loop_pre_header
                  _
                $region168: #{patch_contrastive_forward.3} parent=165 // loop_header
                  %s377 = sphi 0, %s381
                  %p378 = scmp.ge.s32.totalorder %s377, 1
                  %s382 = sphi %s353, %s353
                  %s383 = sphi %s350, %s350
                $region169: #{patch_contrastive_forward.3} parent=165 // loop_header_branch
                  %380 = sbr.rel (%p378) target = $region173
                $region170: #{patch_contrastive_forward.3} parent=165 // loop_body
                  _
                $region171: #{patch_contrastive_forward.3} parent=165 // loop_footer
                  %s381 = sadd.s32 1, %s377
                $region172: #{patch_contrastive_forward.3} parent=165 // loop_footer_branch
                  %376 = sbr.rel target = $region168
                $region173: #{patch_contrastive_forward.3} parent=165 // loop_exit
                  _
                %s385 = ssub.s32 16, 1
                loop: start=0, step=1, limit=1
                $region174: #{patch_contrastive_forward.3} parent=165 // loop_pre_header
                  _
                $region175: #{patch_contrastive_forward.3} parent=165 // loop_header
                  %s387 = sphi 0, %s391
                  %p388 = scmp.ge.s32.totalorder %s387, 1
                  %s392 = sphi %s353, %s353
                  %s393 = sphi %s350, %s350
                $region176: #{patch_contrastive_forward.3} parent=165 // loop_header_branch
                  %390 = sbr.rel (%p388) target = $region180
                $region177: #{patch_contrastive_forward.3} parent=165 // loop_body
                  %v394 = vld [vmem:[%s392] sm:%s385]
                  %395 = vst [vmem:[%s393] sm:%s385] %v394
                  %v396 = vld [vmem:[%s392 + $0x8] sm:%s385]
                  %397 = vst [vmem:[%s393 + $0x4] sm:%s385] %v396
                $region178: #{patch_contrastive_forward.3} parent=165 // loop_footer
                  %s391 = sadd.s32 1, %s387
                $region179: #{patch_contrastive_forward.3} parent=165 // loop_footer_branch
                  %386 = sbr.rel target = $region175
                $region180: #{patch_contrastive_forward.3} parent=165 // loop_exit
                  _
              $region166: #{patch_contrastive_forward.3} parent=150 // pred_fallthru
                _
            $region151: #{patch_contrastive_forward.3} parent=146 // pred_fallthru
              _
            // Predicated region
            $region152: #{patch_contrastive_forward.3} parent=146 // pred_check
              _
            $region153: #{patch_contrastive_forward.3} parent=146 // pred_check_branch
              %359 = sbr.rel (0) target = $region155
            $region154: #{patch_contrastive_forward.3} parent=146 // pred_region
              %s361 = ssub.s32 16, 1
              loop: start=0, step=1, limit=1
              $region156: #{patch_contrastive_forward.3} parent=154 // loop_pre_header
                _
              $region157: #{patch_contrastive_forward.3} parent=154 // loop_header
                %s363 = sphi 0, %s367
                %p364 = scmp.ge.s32.totalorder %s363, 1
                %s368 = sphi %s353, %s353
                %s369 = sphi %s350, %s350
              $region158: #{patch_contrastive_forward.3} parent=154 // loop_header_branch
                %366 = sbr.rel (%p364) target = $region162
              $region159: #{patch_contrastive_forward.3} parent=154 // loop_body
                %v370 = vld [vmem:[%s368] sm:%s361]
                %371 = vst [vmem:[%s369] sm:%s361] %v370
                %v372 = vld [vmem:[%s368 + $0x8] sm:%s361]
                %373 = vst [vmem:[%s369 + $0x4] sm:%s361] %v372
              $region160: #{patch_contrastive_forward.3} parent=154 // loop_footer
                %s367 = sadd.s32 1, %s363
              $region161: #{patch_contrastive_forward.3} parent=154 // loop_footer_branch
                %362 = sbr.rel target = $region157
              $region162: #{patch_contrastive_forward.3} parent=154 // loop_exit
                _
            $region155: #{patch_contrastive_forward.3} parent=146 // pred_fallthru
              _
          $region147: #{patch_contrastive_forward.3} parent=142 // pred_fallthru
            _
          %398 = vnop
        $region143: #{patch_contrastive_forward.3} parent=15 // pred_fallthru
          _
      $region16: #{patch_contrastive_forward.3} parent=5 // pred_fallthru
        _
      %p399 = scmp.le.s32.totalorder 1, %s22
      %p400 = scmp.lt.s32.totalorder %s22, 3
      %p401 = pnand %p399, %p400
      %p402 = pneg %p401
      // Predicated region
      $region181: #{patch_contrastive_forward.3} parent=5 // pred_check
        _
      $region182: #{patch_contrastive_forward.3} parent=5 // pred_check_branch
        %404 = sbr.rel (%p401) target = $region184
      $region183: #{patch_contrastive_forward.3} parent=5 // pred_region
        %s405 = ssub.s32 %s22, 1
        %s406 = sand.u32 %s37, 1
        %s407 = sand.u32 %s37, 1
        %s408 = smul.addr %s407, 8
        %s409 = scalar_lea.vmem [#allocation5], %s408
        // Predicated region
        $region185: #{patch_contrastive_forward.3} parent=183 // pred_check
          %p410 = pneg %p50
        $region186: #{patch_contrastive_forward.3} parent=183 // pred_check_branch
          %412 = sbr.rel (%p410) target = $region188
        $region187: #{patch_contrastive_forward.3} parent=183 // pred_region
          _
        $region188: #{patch_contrastive_forward.3} parent=183 // pred_fallthru
          _
        %s413 = sand.u32 %s65, 1
        %s414 = sand.u32 %s65, 1
        %s415 = smul.addr %s414, 8
        %s416 = scalar_lea.vmem [#allocation6], %s415
        // Predicated region
        $region189: #{patch_contrastive_forward.3} parent=183 // pred_check
          %p417 = pneg %p78
        $region190: #{patch_contrastive_forward.3} parent=183 // pred_check_branch
          %419 = sbr.rel (%p417) target = $region192
        $region191: #{patch_contrastive_forward.3} parent=183 // pred_region
          _
        $region192: #{patch_contrastive_forward.3} parent=183 // pred_fallthru
          _
        %s420 = sand.u32 %s93, 1
        %s421 = sand.u32 %s93, 1
        %s422 = smul.addr %s421, 8
        %s423 = scalar_lea.vmem [#allocation7], %s422
        // Predicated region
        $region193: #{patch_contrastive_forward.3} parent=183 // pred_check
          %p424 = pneg %p106
        $region194: #{patch_contrastive_forward.3} parent=183 // pred_check_branch
          %426 = sbr.rel (%p424) target = $region196
        $region195: #{patch_contrastive_forward.3} parent=183 // pred_region
          _
        $region196: #{patch_contrastive_forward.3} parent=183 // pred_fallthru
          _
        %s427 = sand.u32 %s121, 1
        %s428 = sand.u32 %s121, 1
        %s429 = smul.addr %s428, 8
        %s430 = scalar_lea.vmem [#allocation8], %s429
        // Predicated region
        $region197: #{patch_contrastive_forward.3} parent=183 // pred_check
          %p431 = pneg %p134
        $region198: #{patch_contrastive_forward.3} parent=183 // pred_check_branch
          %433 = sbr.rel (%p431) target = $region200
        $region199: #{patch_contrastive_forward.3} parent=183 // pred_region
          _
        $region200: #{patch_contrastive_forward.3} parent=183 // pred_fallthru
          _
        %s434 = sand.u32 %s37, 1
        %s435 = sand.u32 %s37, 1
        %s436 = smul.addr %s435, 8
        %s437 = scalar_lea.vmem [#allocation5], %s436
        %p438 = pneg %p50
        %p439 = pneg %p47
        %s440 = sand.u32 %s65, 1
        %s441 = sand.u32 %s65, 1
        %s442 = smul.addr %s441, 8
        %s443 = scalar_lea.vmem [#allocation6], %s442
        %p444 = pneg %p78
        %p445 = pneg %p75
        %s446 = sand.u32 %s93, 1
        %s447 = sand.u32 %s93, 1
        %s448 = smul.addr %s447, 8
        %s449 = scalar_lea.vmem [#allocation7], %s448
        %p450 = pneg %p106
        %p451 = pneg %p103
        %s452 = sand.u32 %s121, 1
        %s453 = sand.u32 %s121, 1
        %s454 = smul.addr %s453, 8
        %s455 = scalar_lea.vmem [#allocation8], %s454
        %p456 = pneg %p134
        %p457 = pneg %p131
        %p458 = pneg %p160
        %p459 = pneg %p157
        %p460 = scmp.lt.s32.totalorder %s27, 1
        %s461 = scalar_select %p460, %s27, 1
        %s462 = smul.addr %s461, 8
        %s463 = scalar_lea.vmem %s6, %s462
        %s464 = sld [smem:[#allocation3 + %s27]]
        %s465 = sld [smem:[#allocation4 + %s27]]
        %s466 = sld [smem:[#allocation3 + %s27]]
        %s467 = sld [smem:[#allocation4 + %s27]]
        %p468 = scmp.lt.s32.totalorder %s27, 1
        %s469 = scalar_select %p468, %s27, 1
        %s470 = smul.addr %s469, 8
        %s471 = scalar_lea.vmem %s6, %s470
        %v472 = vld [vmem:[%s409] sm:$0xf]
        %v473 = vld [vmem:[%s409 + $0x4] sm:$0xf]
        %v474 = vld [vmem:[%s416] sm:$0xf]
        %v475 = vld [vmem:[%s416 + $0x4] sm:$0xf]
        %v476 = vld [vmem:[%s423] sm:$0xf]
        %v477 = vld [vmem:[%s423 + $0x4] sm:$0xf]
        %v478 = vld [vmem:[%s430] sm:$0xf]
        %v479 = vld [vmem:[%s430 + $0x4] sm:$0xf]
        %v480 = vmul.f32 %v472, %v472
        %v481 = vmul.f32 %v473, %v473
        %vm482 = vcmask 1043456
        %v483 = vsel %vm482, %v480, 0.0
        %484 = vadd.xlane.f32.xlu0 %v483
        %v485 = vpop.xlane.xlu0 %484
        %v486 = vsel %vm482, %v481, 0.0
        %487 = vadd.xlane.f32.xlu0 %v486
        %v488 = vpop.xlane.xlu0 %487
        %v489 = vmul.f32 %v476, %v476
        %v490 = vmul.f32 %v477, %v477
        %v491 = vsel %vm482, %v489, 0.0
        %492 = vadd.xlane.f32.xlu0 %v491
        %v493 = vpop.xlane.xlu0 %492
        %v494 = vsel %vm482, %v490, 0.0
        %495 = vadd.xlane.f32.xlu0 %v494
        %v496 = vpop.xlane.xlu0 %495
        %v497 = vadd.f32 %v485, %v493
        %v498 = vadd.f32 %v488, %v496
        %v499 = vadd.f32 %v497, 1e-08
        %v500 = vadd.f32 %v498, 1e-08
        %v501 = vrsqrt.pop %v499
        %v502 = vrsqrt.pop %v500
        %v503 = vmul.f32 %v474, %v474
        %v504 = vmul.f32 %v475, %v475
        %v505 = vsel %vm482, %v503, 0.0
        %506 = vadd.xlane.f32.xlu0 %v505
        %v507 = vpop.xlane.xlu0 %506
        %v508 = vsel %vm482, %v504, 0.0
        %509 = vadd.xlane.f32.xlu0 %v508
        %v510 = vpop.xlane.xlu0 %509
        %v511 = vmul.f32 %v478, %v478
        %v512 = vmul.f32 %v479, %v479
        %v513 = vsel %vm482, %v511, 0.0
        %514 = vadd.xlane.f32.xlu0 %v513
        %v515 = vpop.xlane.xlu0 %514
        %v516 = vsel %vm482, %v512, 0.0
        %517 = vadd.xlane.f32.xlu0 %v516
        %v518 = vpop.xlane.xlu0 %517
        %v519 = vadd.f32 %v507, %v515
        %v520 = vadd.f32 %v510, %v518
        %v521 = vadd.f32 %v519, 1e-08
        %v522 = vadd.f32 %v520, 1e-08
        %v523 = vrsqrt.pop %v521
        %v524 = vrsqrt.pop %v522
        %v525 = vmul.f32 %v472, %v501
        %v526 = vmul.f32 %v473, %v502
        %v527 = vmul.f32 %v476, %v501
        %v528 = vmul.f32 %v477, %v502
        %v529 = vmul.f32 %v474, %v523
        %v530 = vmul.f32 %v475, %v524
        %v531 = vmul.f32 %v478, %v523
        %v532 = vmul.f32 %v479, %v524
        %533 = vmatprep.subr.mxu0 0.0
        %534 = vmatpush1.xpose.msra.mxu0 0.0
        %535 = vmatprep.subr.mxu0 0.0
        %536 = vmatpush1.xpose.msra.mxu0 0.0
        %537 = vmatprep.subr.mxu0 0.0
        %538 = vmatpush1.xpose.msra.mxu0 0.0
        %539 = vmatprep.subr.mxu0 0.0
        %540 = vmatpush1.xpose.msra.mxu0 0.0
        %541 = vmatprep.subr.mxu0 0.0
        %542 = vmatpush1.xpose.msra.mxu0 0.0
        %543 = vmatprep.subr.mxu0 0.0
        %544 = vmatpush1.xpose.msra.mxu0 0.0
        %545 = vmatprep.subr.mxu0 0.0
        %546 = vmatpush1.xpose.msra.mxu0 0.0
        %547 = vmatprep.subr.mxu0 0.0
        %548 = vmatpush1.xpose.msra.mxu0 0.0
        %549 = vmatprep.subr.mxu0 0.0
        %550 = vmatpush1.xpose.msra.mxu0 0.0
        %551 = vmatprep.subr.mxu0 0.0
        %552 = vmatpush1.xpose.msra.mxu0 0.0
        %553 = vmatprep.subr.mxu0 0.0
        %554 = vmatpush1.xpose.msra.mxu0 0.0
        %555 = vmatprep.subr.mxu0 0.0
        %556 = vmatpush1.xpose.msra.mxu0 0.0
        %557 = vmatprep.subr.mxu0 0.0
        %558 = vmatpush1.xpose.msra.mxu0 0.0
        %559 = vmatprep.subr.mxu0 0.0
        %560 = vmatpush1.xpose.msra.mxu0 0.0
        %561 = vmatprep.subr.mxu0 0.0
        %562 = vmatpush1.xpose.msra.mxu0 0.0
        %563 = vmatprep.subr.mxu0 0.0
        %564 = vmatpush1.xpose.msra.mxu0 %v529
        %565 = vmatprep.subr.mxu0 0.0
        %566 = vmatpush2.xpose.msra.mxu0 0.0
        %567 = vmatprep.subr.mxu0 0.0
        %568 = vmatpush2.xpose.msra.mxu0 0.0
        %569 = vmatprep.subr.mxu0 0.0
        %570 = vmatpush2.xpose.msra.mxu0 0.0
        %571 = vmatprep.subr.mxu0 0.0
        %572 = vmatpush2.xpose.msra.mxu0 0.0
        %573 = vmatprep.subr.mxu0 0.0
        %574 = vmatpush2.xpose.msra.mxu0 0.0
        %575 = vmatprep.subr.mxu0 0.0
        %576 = vmatpush2.xpose.msra.mxu0 0.0
        %577 = vmatprep.subr.mxu0 0.0
        %578 = vmatpush2.xpose.msra.mxu0 0.0
        %579 = vmatprep.subr.mxu0 0.0
        %580 = vmatpush2.xpose.msra.mxu0 0.0
        %581 = vmatprep.subr.mxu0 0.0
        %582 = vmatpush2.xpose.msra.mxu0 0.0
        %583 = vmatprep.subr.mxu0 0.0
        %584 = vmatpush2.xpose.msra.mxu0 0.0
        %585 = vmatprep.subr.mxu0 0.0
        %586 = vmatpush2.xpose.msra.mxu0 0.0
        %587 = vmatprep.subr.mxu0 0.0
        %588 = vmatpush2.xpose.msra.mxu0 0.0
        %589 = vmatprep.subr.mxu0 0.0
        %590 = vmatpush2.xpose.msra.mxu0 0.0
        %591 = vmatprep.subr.mxu0 0.0
        %592 = vmatpush2.xpose.msra.mxu0 0.0
        %593 = vmatprep.subr.mxu0 0.0
        %594 = vmatpush2.xpose.msra.mxu0 0.0
        %595 = vmatprep.subr.mxu0 0.0
        %596 = vmatpush2.xpose.msra.mxu0 0.0
        %597 = vmatprep.mubr.f32.mxu0 0.0
        %598 = vmatmul.mubr.f32.gmra.mxu0 %v525
        %v599 = vpop.f32.mrf.mxu0
        %v600 = vadd.f32 0.0, %v599
        %v601 = vpop.f32.mrf.mxu0
        %602 = vdwg.mxu0
        %603 = vmatprep.subr.mxu0 0.0
        %604 = vmatpush1.xpose.msra.mxu0 0.0
        %605 = vmatprep.subr.mxu0 0.0
        %606 = vmatpush1.xpose.msra.mxu0 0.0
        %607 = vmatprep.subr.mxu0 0.0
        %608 = vmatpush1.xpose.msra.mxu0 0.0
        %609 = vmatprep.subr.mxu0 0.0
        %610 = vmatpush1.xpose.msra.mxu0 0.0
        %611 = vmatprep.subr.mxu0 0.0
        %612 = vmatpush1.xpose.msra.mxu0 0.0
        %613 = vmatprep.subr.mxu0 0.0
        %614 = vmatpush1.xpose.msra.mxu0 0.0
        %615 = vmatprep.subr.mxu0 0.0
        %616 = vmatpush1.xpose.msra.mxu0 0.0
        %617 = vmatprep.subr.mxu0 0.0
        %618 = vmatpush1.xpose.msra.mxu0 0.0
        %619 = vmatprep.subr.mxu0 0.0
        %620 = vmatpush1.xpose.msra.mxu0 0.0
        %621 = vmatprep.subr.mxu0 0.0
        %622 = vmatpush1.xpose.msra.mxu0 0.0
        %623 = vmatprep.subr.mxu0 0.0
        %624 = vmatpush1.xpose.msra.mxu0 0.0
        %625 = vmatprep.subr.mxu0 0.0
        %626 = vmatpush1.xpose.msra.mxu0 0.0
        %627 = vmatprep.subr.mxu0 0.0
        %628 = vmatpush1.xpose.msra.mxu0 0.0
        %629 = vmatprep.subr.mxu0 0.0
        %630 = vmatpush1.xpose.msra.mxu0 0.0
        %631 = vmatprep.subr.mxu0 0.0
        %632 = vmatpush1.xpose.msra.mxu0 0.0
        %633 = vmatprep.subr.mxu0 0.0
        %634 = vmatpush1.xpose.msra.mxu0 %v530
        %635 = vmatprep.subr.mxu0 0.0
        %636 = vmatpush2.xpose.msra.mxu0 0.0
        %637 = vmatprep.subr.mxu0 0.0
        %638 = vmatpush2.xpose.msra.mxu0 0.0
        %639 = vmatprep.subr.mxu0 0.0
        %640 = vmatpush2.xpose.msra.mxu0 0.0
        %641 = vmatprep.subr.mxu0 0.0
        %642 = vmatpush2.xpose.msra.mxu0 0.0
        %643 = vmatprep.subr.mxu0 0.0
        %644 = vmatpush2.xpose.msra.mxu0 0.0
        %645 = vmatprep.subr.mxu0 0.0
        %646 = vmatpush2.xpose.msra.mxu0 0.0
        %647 = vmatprep.subr.mxu0 0.0
        %648 = vmatpush2.xpose.msra.mxu0 0.0
        %649 = vmatprep.subr.mxu0 0.0
        %650 = vmatpush2.xpose.msra.mxu0 0.0
        %651 = vmatprep.subr.mxu0 0.0
        %652 = vmatpush2.xpose.msra.mxu0 0.0
        %653 = vmatprep.subr.mxu0 0.0
        %654 = vmatpush2.xpose.msra.mxu0 0.0
        %655 = vmatprep.subr.mxu0 0.0
        %656 = vmatpush2.xpose.msra.mxu0 0.0
        %657 = vmatprep.subr.mxu0 0.0
        %658 = vmatpush2.xpose.msra.mxu0 0.0
        %659 = vmatprep.subr.mxu0 0.0
        %660 = vmatpush2.xpose.msra.mxu0 0.0
        %661 = vmatprep.subr.mxu0 0.0
        %662 = vmatpush2.xpose.msra.mxu0 0.0
        %663 = vmatprep.subr.mxu0 0.0
        %664 = vmatpush2.xpose.msra.mxu0 0.0
        %665 = vmatprep.subr.mxu0 0.0
        %666 = vmatpush2.xpose.msra.mxu0 0.0
        %667 = vmatprep.mubr.f32.mxu0 0.0
        %668 = vmatmul.mubr.f32.gmra.mxu0 %v526
        %v669 = vpop.f32.mrf.mxu0
        %v670 = vadd.f32 0.0, %v669
        %v671 = vpop.f32.mrf.mxu0
        %672 = vdwg.mxu0
        %673 = vmatprep.subr.mxu0 0.0
        %674 = vmatpush1.xpose.msra.mxu0 0.0
        %675 = vmatprep.subr.mxu0 0.0
        %676 = vmatpush1.xpose.msra.mxu0 0.0
        %677 = vmatprep.subr.mxu0 0.0
        %678 = vmatpush1.xpose.msra.mxu0 0.0
        %679 = vmatprep.subr.mxu0 0.0
        %680 = vmatpush1.xpose.msra.mxu0 0.0
        %681 = vmatprep.subr.mxu0 0.0
        %682 = vmatpush1.xpose.msra.mxu0 0.0
        %683 = vmatprep.subr.mxu0 0.0
        %684 = vmatpush1.xpose.msra.mxu0 0.0
        %685 = vmatprep.subr.mxu0 0.0
        %686 = vmatpush1.xpose.msra.mxu0 0.0
        %687 = vmatprep.subr.mxu0 0.0
        %688 = vmatpush1.xpose.msra.mxu0 0.0
        %689 = vmatprep.subr.mxu0 0.0
        %690 = vmatpush1.xpose.msra.mxu0 0.0
        %691 = vmatprep.subr.mxu0 0.0
        %692 = vmatpush1.xpose.msra.mxu0 0.0
        %693 = vmatprep.subr.mxu0 0.0
        %694 = vmatpush1.xpose.msra.mxu0 0.0
        %695 = vmatprep.subr.mxu0 0.0
        %696 = vmatpush1.xpose.msra.mxu0 0.0
        %697 = vmatprep.subr.mxu0 0.0
        %698 = vmatpush1.xpose.msra.mxu0 0.0
        %699 = vmatprep.subr.mxu0 0.0
        %700 = vmatpush1.xpose.msra.mxu0 0.0
        %701 = vmatprep.subr.mxu0 0.0
        %702 = vmatpush1.xpose.msra.mxu0 0.0
        %703 = vmatprep.subr.mxu0 0.0
        %704 = vmatpush1.xpose.msra.mxu0 %v531
        %705 = vmatprep.subr.mxu0 0.0
        %706 = vmatpush2.xpose.msra.mxu0 0.0
        %707 = vmatprep.subr.mxu0 0.0
        %708 = vmatpush2.xpose.msra.mxu0 0.0
        %709 = vmatprep.subr.mxu0 0.0
        %710 = vmatpush2.xpose.msra.mxu0 0.0
        %711 = vmatprep.subr.mxu0 0.0
        %712 = vmatpush2.xpose.msra.mxu0 0.0
        %713 = vmatprep.subr.mxu0 0.0
        %714 = vmatpush2.xpose.msra.mxu0 0.0
        %715 = vmatprep.subr.mxu0 0.0
        %716 = vmatpush2.xpose.msra.mxu0 0.0
        %717 = vmatprep.subr.mxu0 0.0
        %718 = vmatpush2.xpose.msra.mxu0 0.0
        %719 = vmatprep.subr.mxu0 0.0
        %720 = vmatpush2.xpose.msra.mxu0 0.0
        %721 = vmatprep.subr.mxu0 0.0
        %722 = vmatpush2.xpose.msra.mxu0 0.0
        %723 = vmatprep.subr.mxu0 0.0
        %724 = vmatpush2.xpose.msra.mxu0 0.0
        %725 = vmatprep.subr.mxu0 0.0
        %726 = vmatpush2.xpose.msra.mxu0 0.0
        %727 = vmatprep.subr.mxu0 0.0
        %728 = vmatpush2.xpose.msra.mxu0 0.0
        %729 = vmatprep.subr.mxu0 0.0
        %730 = vmatpush2.xpose.msra.mxu0 0.0
        %731 = vmatprep.subr.mxu0 0.0
        %732 = vmatpush2.xpose.msra.mxu0 0.0
        %733 = vmatprep.subr.mxu0 0.0
        %734 = vmatpush2.xpose.msra.mxu0 0.0
        %735 = vmatprep.subr.mxu0 0.0
        %736 = vmatpush2.xpose.msra.mxu0 0.0
        %737 = vmatprep.mubr.f32.mxu0 0.0
        %738 = vmatmul.mubr.f32.gmra.mxu0 %v527
        %v739 = vpop.f32.mrf.mxu0
        %v740 = vadd.f32 %v600, %v739
        %v741 = vpop.f32.mrf.mxu0
        %742 = vdwg.mxu0
        %743 = vmatprep.subr.mxu0 0.0
        %744 = vmatpush1.xpose.msra.mxu0 0.0
        %745 = vmatprep.subr.mxu0 0.0
        %746 = vmatpush1.xpose.msra.mxu0 0.0
        %747 = vmatprep.subr.mxu0 0.0
        %748 = vmatpush1.xpose.msra.mxu0 0.0
        %749 = vmatprep.subr.mxu0 0.0
        %750 = vmatpush1.xpose.msra.mxu0 0.0
        %751 = vmatprep.subr.mxu0 0.0
        %752 = vmatpush1.xpose.msra.mxu0 0.0
        %753 = vmatprep.subr.mxu0 0.0
        %754 = vmatpush1.xpose.msra.mxu0 0.0
        %755 = vmatprep.subr.mxu0 0.0
        %756 = vmatpush1.xpose.msra.mxu0 0.0
        %757 = vmatprep.subr.mxu0 0.0
        %758 = vmatpush1.xpose.msra.mxu0 0.0
        %759 = vmatprep.subr.mxu0 0.0
        %760 = vmatpush1.xpose.msra.mxu0 0.0
        %761 = vmatprep.subr.mxu0 0.0
        %762 = vmatpush1.xpose.msra.mxu0 0.0
        %763 = vmatprep.subr.mxu0 0.0
        %764 = vmatpush1.xpose.msra.mxu0 0.0
        %765 = vmatprep.subr.mxu0 0.0
        %766 = vmatpush1.xpose.msra.mxu0 0.0
        %767 = vmatprep.subr.mxu0 0.0
        %768 = vmatpush1.xpose.msra.mxu0 0.0
        %769 = vmatprep.subr.mxu0 0.0
        %770 = vmatpush1.xpose.msra.mxu0 0.0
        %771 = vmatprep.subr.mxu0 0.0
        %772 = vmatpush1.xpose.msra.mxu0 0.0
        %773 = vmatprep.subr.mxu0 0.0
        %774 = vmatpush1.xpose.msra.mxu0 %v532
        %775 = vmatprep.subr.mxu0 0.0
        %776 = vmatpush2.xpose.msra.mxu0 0.0
        %777 = vmatprep.subr.mxu0 0.0
        %778 = vmatpush2.xpose.msra.mxu0 0.0
        %779 = vmatprep.subr.mxu0 0.0
        %780 = vmatpush2.xpose.msra.mxu0 0.0
        %781 = vmatprep.subr.mxu0 0.0
        %782 = vmatpush2.xpose.msra.mxu0 0.0
        %783 = vmatprep.subr.mxu0 0.0
        %784 = vmatpush2.xpose.msra.mxu0 0.0
        %785 = vmatprep.subr.mxu0 0.0
        %786 = vmatpush2.xpose.msra.mxu0 0.0
        %787 = vmatprep.subr.mxu0 0.0
        %788 = vmatpush2.xpose.msra.mxu0 0.0
        %789 = vmatprep.subr.mxu0 0.0
        %790 = vmatpush2.xpose.msra.mxu0 0.0
        %791 = vmatprep.subr.mxu0 0.0
        %792 = vmatpush2.xpose.msra.mxu0 0.0
        %793 = vmatprep.subr.mxu0 0.0
        %794 = vmatpush2.xpose.msra.mxu0 0.0
        %795 = vmatprep.subr.mxu0 0.0
        %796 = vmatpush2.xpose.msra.mxu0 0.0
        %797 = vmatprep.subr.mxu0 0.0
        %798 = vmatpush2.xpose.msra.mxu0 0.0
        %799 = vmatprep.subr.mxu0 0.0
        %800 = vmatpush2.xpose.msra.mxu0 0.0
        %801 = vmatprep.subr.mxu0 0.0
        %802 = vmatpush2.xpose.msra.mxu0 0.0
        %803 = vmatprep.subr.mxu0 0.0
        %804 = vmatpush2.xpose.msra.mxu0 0.0
        %805 = vmatprep.subr.mxu0 0.0
        %806 = vmatpush2.xpose.msra.mxu0 0.0
        %807 = vmatprep.mubr.f32.mxu0 0.0
        %808 = vmatmul.mubr.f32.gmra.mxu0 %v528
        %v809 = vpop.f32.mrf.mxu0
        %v810 = vadd.f32 %v670, %v809
        %v811 = vpop.f32.mrf.mxu0
        %812 = vdwg.mxu0
        %v813 = vmul.f32 %v740, 10.0
        %v814 = vmul.f32 %v810, 10.0
        %vm815 = vcmask 27648
        %v816 = vsel %vm815, %v813, -inf
        %817 = vmax.xlane.f32.xlu0 %v816
        %v818 = vpop.xlane.xlu0 %817
        %v819 = vsel %vm815, %v814, -inf
        %820 = vmax.xlane.f32.xlu0 %v819
        %v821 = vpop.xlane.xlu0 %820
        %v822 = vsub.f32 %v813, %v818
        %v823 = vsub.f32 %v814, %v821
        %v824 = vmul.f32 %v822, 1.442695
        %v825 = vpow.pop %v824
        %v826 = vmul.f32 %v823, 1.442695
        %v827 = vpow.pop %v826
        %v828 = vsel %vm815, %v825, 0.0
        %829 = vadd.xlane.f32.xlu0 %v828
        %v830 = vpop.xlane.xlu0 %829
        %v831 = vsel %vm815, %v827, 0.0
        %832 = vadd.xlane.f32.xlu0 %v831
        %v833 = vpop.xlane.xlu0 %832
        %v834 = vlog2.pop %v830
        %v835 = vmul.f32 %v834, 0.6931472
        %v836 = vlog2.pop %v833
        %v837 = vmul.f32 %v836, 0.6931472
        %v838 = vadd.f32 %v835, %v818
        %v839 = vadd.f32 %v837, %v821
        %v840 = vmul.f32 %v527, %v531
        %v841 = vmul.f32 %v528, %v532
        %v842 = vsel %vm482, %v840, 0.0
        %843 = vadd.xlane.f32.xlu0 %v842
        %v844 = vpop.xlane.xlu0 %843
        %v845 = vsel %vm482, %v841, 0.0
        %846 = vadd.xlane.f32.xlu0 %v845
        %v847 = vpop.xlane.xlu0 %846
        %v848 = vmul.f32 %v525, %v529
        %v849 = vmul.f32 %v526, %v530
        %v850 = vsel %vm482, %v848, 0.0
        %851 = vadd.xlane.f32.xlu0 %v850
        %v852 = vpop.xlane.xlu0 %851
        %v853 = vsel %vm482, %v849, 0.0
        %854 = vadd.xlane.f32.xlu0 %v853
        %v855 = vpop.xlane.xlu0 %854
        %v856 = vadd.f32 %v844, %v852
        %v857 = vadd.f32 %v847, %v855
        %v858 = vmul.f32 %v856, 10.0
        %v859 = vmul.f32 %v857, 10.0
        %v860 = vsub.f32 %v838, %v858
        %v861 = vsub.f32 %v839, %v859
        %vm862 = vcmask 3072
        %v863 = vsel %vm862, %v860, 0.0
        %v864 = vsel %vm862, %v861, 0.0
        %v865 = vadd.f32 %v863, %v864
        %866 = vadd.xlane.f32.xlu0 %v865
        %v867 = vpop.xlane.xlu0 %866
        %v868 = vrot.slane %v867, 4
        %v869 = vadd.f32 %v867, %v868
        %v870 = vrot.slane %v869, 2
        %v871 = vadd.f32 %v869, %v870
        %v872 = vrot.slane %v871, 1
        %v873 = vadd.f32 %v871, %v872
        %s874 = vtos %v873
        %v875 = vrcp.pop 8.0
        %s876 = vtos %v875
        %s877 = smul.f32 %s874, %s876
        %v878 = vstv %s877
        %879 = vst [vmem:[%s471] sm:$0xff] %v878
        %p880 = scmp.lt.s32.totalorder %s27, 1
        %s881 = scalar_select %p880, %s27, 1
        %s882 = smul.addr %s881, 8
        %s883 = scalar_lea.vmem %s6, %s882
        // Predicated region
        $region201: #{patch_contrastive_forward.3} parent=183 // pred_check
          %p884 = pneg %p157
        $region202: #{patch_contrastive_forward.3} parent=183 // pred_check_branch
          %886 = sbr.rel (%p884) target = $region204
        $region203: #{patch_contrastive_forward.3} parent=183 // pred_region
          _
        $region204: #{patch_contrastive_forward.3} parent=183 // pred_fallthru
          _
      $region184: #{patch_contrastive_forward.3} parent=5 // pred_fallthru
        _
      %p887 = scmp.le.s32.totalorder 2, %s22
      // Predicated region
      $region205: #{patch_contrastive_forward.3} parent=5 // pred_check
        %p888 = pneg %p887
      $region206: #{patch_contrastive_forward.3} parent=5 // pred_check_branch
        %890 = sbr.rel (%p888) target = $region208
      $region207: #{patch_contrastive_forward.3} parent=5 // pred_region
        %s891 = ssub.s32 %s22, 2
        // Predicated region
        $region209: #{patch_contrastive_forward.3} parent=207 // pred_check
          %p892 = pneg %p163
        $region210: #{patch_contrastive_forward.3} parent=207 // pred_check_branch
          %894 = sbr.rel (%p892) target = $region212
        $region211: #{patch_contrastive_forward.3} parent=207 // pred_region
          %p895 = scmp.lt.s32.totalorder %s28, 1
          %s896 = scalar_select %p895, %s28, 1
          %s897 = smul.addr %s896, 8
          %s898 = scalar_lea.vmem %s6, %s897
        $region212: #{patch_contrastive_forward.3} parent=207 // pred_fallthru
          _
      $region208: #{patch_contrastive_forward.3} parent=5 // pred_fallthru
        _
    $region6: #{patch_contrastive_forward.3} parent=1 // loop_footer
      %s26 = sadd.s32 1, %s22
    $region7: #{patch_contrastive_forward.3} parent=1 // loop_footer_branch
      %21 = sbr.rel target = $region3
    $region8: #{patch_contrastive_forward.3} parent=1 // loop_exit
      _

// kernel: patch_contrastive_forward.2
$region0: #{patch_contrastive_forward.2}
  #allocation0 [shape = 'u32[]', space=smem, size = 0x4, offset = 0x4, fixed_abs, tag = 'smem constant byte address 0x4 - core index']
  #allocation1 [shape = 'u32[144,128]{1,0:T(1,128)}', space=vmem, size = 0x12000, scoped, tag = 'internal scratch']
  %s0 = inlined_call_operand.vmem [shape: bf16[16,256], index: 0, kind: input, shape index: {}]
  %s1 = inlined_call_operand.vmem [shape: bf16[16,768], index: 1, kind: input, shape index: {}]
  %s2 = inlined_call_operand.vmem [shape: bf16[768,128], index: 2, kind: input, shape index: {}]
  %s3 = inlined_call_operand.vmem [shape: f32[1,128], index: 3, kind: input, shape index: {}]
  %s4 = inlined_call_operand.vmem [shape: f32[16,128], index: 4, kind: output, shape index: {}]
  %s5 = sld [smem:[#allocation0]]
  $region49: #{patch_contrastive_forward.2} parent=0
    _
  %s7 = ssub.s32 1, %s5
  %s8 = scalar_select 0, %s7, %s5
  loop: start=0, step=1, limit=4
  $region2: #{patch_contrastive_forward.2} parent=0 // loop_pre_header
    _
  $region3: #{patch_contrastive_forward.2} parent=0 // loop_header
    %s10 = sphi 0, %s14
    %p11 = scmp.ge.s32.totalorder %s10, 4
    %s20 = sphi 0, %s22
    %s23 = sphi 0, %s20
    %s24 = sphi 0, %s23
    %s40 = sphi 0, %s24
    %s46 = sphi 0, %s48
    %s49 = sphi 0, %s46
    %s50 = sphi 0, %s49
    %s66 = sphi 0, %s50
    %s70 = sphi 0, %s70
    %s72 = sphi 0, %s70
    %s73 = sphi 0, %s72
    %s87 = sphi 0, %s73
    %s91 = sphi 0, %s91
    %s93 = sphi 0, %s91
    %s94 = sphi 0, %s93
    %s108 = sphi 0, %s94
    %s114 = sphi 0, %s116
    %s117 = sphi 0, %s114
    %s118 = sphi 0, %s117
    %s134 = sphi 0, %s118
  $region4: #{patch_contrastive_forward.2} parent=0 // loop_header_branch
    %13 = sbr.rel (%p11) target = $region8
  $region5: #{patch_contrastive_forward.2} parent=0 // loop_body
    %s15 = ssub.s32 %s10, 1
    %s16 = ssub.s32 %s10, 2
    %s17 = sadd.s32 %s10, 1
    %s18 = ssub.s32 %s10, %s17
    %p19 = scmp.eq.s32.totalorder %s18, 0
    %s21 = sadd.s32 %s20, 1
    %s22 = scalar_select %p19, %s20, %s21
    %p25 = pneg %p19
    %p26 = scmp.eq.s32.totalorder %s10, 1
    %p27 = por %p25, %p26
    %p28 = scmp.ne.s32.totalorder %s20, %s23
    %p29 = scmp.eq.s32.totalorder %s10, 0
    %p30 = por %p28, %p29
    %p31 = scmp.ne.s32.totalorder %s20, %s23
    %p32 = scmp.eq.s32.totalorder %s15, 1
    %p33 = por %p31, %p32
    %p34 = scmp.ne.s32.totalorder %s23, %s24
    %p35 = scmp.eq.s32.totalorder %s15, 0
    %p36 = por %p34, %p35
    %p37 = scmp.ne.s32.totalorder %s23, %s24
    %p38 = scmp.eq.s32.totalorder %s16, 1
    %p39 = por %p37, %p38
    %p41 = scmp.ne.s32.totalorder %s24, %s40
    %p42 = scmp.eq.s32.totalorder %s16, 0
    %p43 = por %p41, %p42
    %s44 = ssub.s32 %s10, %s17
    %p45 = scmp.eq.s32.totalorder %s44, 0
    %s47 = sadd.s32 %s46, 1
    %s48 = scalar_select %p45, %s46, %s47
    %p51 = pneg %p45
    %p52 = scmp.eq.s32.totalorder %s10, 1
    %p53 = por %p51, %p52
    %p54 = scmp.ne.s32.totalorder %s46, %s49
    %p55 = scmp.eq.s32.totalorder %s10, 0
    %p56 = por %p54, %p55
    %p57 = scmp.ne.s32.totalorder %s46, %s49
    %p58 = scmp.eq.s32.totalorder %s15, 1
    %p59 = por %p57, %p58
    %p60 = scmp.ne.s32.totalorder %s49, %s50
    %p61 = scmp.eq.s32.totalorder %s15, 0
    %p62 = por %p60, %p61
    %p63 = scmp.ne.s32.totalorder %s49, %s50
    %p64 = scmp.eq.s32.totalorder %s16, 1
    %p65 = por %p63, %p64
    %p67 = scmp.ne.s32.totalorder %s50, %s66
    %p68 = scmp.eq.s32.totalorder %s16, 0
    %p69 = por %p67, %p68
    %s71 = sadd.s32 %s70, 1
    %p74 = scmp.eq.s32.totalorder %s10, 1
    %p75 = scmp.ne.s32.totalorder %s70, %s72
    %p76 = scmp.eq.s32.totalorder %s10, 0
    %p77 = por %p75, %p76
    %p78 = scmp.ne.s32.totalorder %s70, %s72
    %p79 = scmp.eq.s32.totalorder %s15, 1
    %p80 = por %p78, %p79
    %p81 = scmp.ne.s32.totalorder %s72, %s73
    %p82 = scmp.eq.s32.totalorder %s15, 0
    %p83 = por %p81, %p82
    %p84 = scmp.ne.s32.totalorder %s72, %s73
    %p85 = scmp.eq.s32.totalorder %s16, 1
    %p86 = por %p84, %p85
    %p88 = scmp.ne.s32.totalorder %s73, %s87
    %p89 = scmp.eq.s32.totalorder %s16, 0
    %p90 = por %p88, %p89
    %s92 = sadd.s32 %s91, 1
    %p95 = scmp.eq.s32.totalorder %s10, 1
    %p96 = scmp.ne.s32.totalorder %s91, %s93
    %p97 = scmp.eq.s32.totalorder %s10, 0
    %p98 = por %p96, %p97
    %p99 = scmp.ne.s32.totalorder %s91, %s93
    %p100 = scmp.eq.s32.totalorder %s15, 1
    %p101 = por %p99, %p100
    %p102 = scmp.ne.s32.totalorder %s93, %s94
    %p103 = scmp.eq.s32.totalorder %s15, 0
    %p104 = por %p102, %p103
    %p105 = scmp.ne.s32.totalorder %s93, %s94
    %p106 = scmp.eq.s32.totalorder %s16, 1
    %p107 = por %p105, %p106
    %p109 = scmp.ne.s32.totalorder %s94, %s108
    %p110 = scmp.eq.s32.totalorder %s16, 0
    %p111 = por %p109, %p110
    %s112 = ssub.s32 %s10, %s17
    %p113 = scmp.eq.s32.totalorder %s112, 0
    %s115 = sadd.s32 %s114, 1
    %s116 = scalar_select %p113, %s114, %s115
    %p119 = pneg %p113
    %p120 = scmp.eq.s32.totalorder %s10, 1
    %p121 = por %p119, %p120
    %p122 = scmp.ne.s32.totalorder %s114, %s117
    %p123 = scmp.eq.s32.totalorder %s10, 0
    %p124 = por %p122, %p123
    %p125 = scmp.ne.s32.totalorder %s114, %s117
    %p126 = scmp.eq.s32.totalorder %s15, 1
    %p127 = por %p125, %p126
    %p128 = scmp.ne.s32.totalorder %s117, %s118
    %p129 = scmp.eq.s32.totalorder %s15, 0
    %p130 = por %p128, %p129
    %p131 = scmp.ne.s32.totalorder %s117, %s118
    %p132 = scmp.eq.s32.totalorder %s16, 1
    %p133 = por %p131, %p132
    %p135 = scmp.ne.s32.totalorder %s118, %s134
    %p136 = scmp.eq.s32.totalorder %s16, 0
    %p137 = por %p135, %p136
    %p138 = scmp.le.s32.totalorder 1, %s10
    %p139 = scmp.lt.s32.totalorder %s10, 3
    %p140 = pnand %p138, %p139
    %p141 = pneg %p140
    // Predicated region
    $region9: #{patch_contrastive_forward.2} parent=5 // pred_check
      _
    $region10: #{patch_contrastive_forward.2} parent=5 // pred_check_branch
      %143 = sbr.rel (%p140) target = $region12
    $region11: #{patch_contrastive_forward.2} parent=5 // pred_region
      %s144 = ssub.s32 %s10, 1
      // Predicated region
      $region13: #{patch_contrastive_forward.2} parent=11 // pred_check
        %p145 = pneg %p83
      $region14: #{patch_contrastive_forward.2} parent=11 // pred_check_branch
        %147 = sbr.rel (%p145) target = $region16
      $region15: #{patch_contrastive_forward.2} parent=11 // pred_region
        _
      $region16: #{patch_contrastive_forward.2} parent=11 // pred_fallthru
        _
      // Predicated region
      $region17: #{patch_contrastive_forward.2} parent=11 // pred_check
        %p148 = pneg %p104
      $region18: #{patch_contrastive_forward.2} parent=11 // pred_check_branch
        %150 = sbr.rel (%p148) target = $region20
      $region19: #{patch_contrastive_forward.2} parent=11 // pred_region
        _
      $region20: #{patch_contrastive_forward.2} parent=11 // pred_fallthru
        _
    $region12: #{patch_contrastive_forward.2} parent=5 // pred_fallthru
      _
    %p151 = scmp.lt.s32.totalorder %s10, 2
    // Predicated region
    $region21: #{patch_contrastive_forward.2} parent=5 // pred_check
      %p152 = pneg %p151
    $region22: #{patch_contrastive_forward.2} parent=5 // pred_check_branch
      %154 = sbr.rel (%p152) target = $region24
    $region23: #{patch_contrastive_forward.2} parent=5 // pred_region
      // Predicated region
      $region25: #{patch_contrastive_forward.2} parent=23 // pred_check
        %p155 = pneg %p30
      $region26: #{patch_contrastive_forward.2} parent=23 // pred_check_branch
        %157 = sbr.rel (%p155) target = $region28
      $region27: #{patch_contrastive_forward.2} parent=23 // pred_region
        %p158 = scmp.lt.s32.totalorder %s10, 1
        %s159 = scalar_select %p158, %s10, 1
        %s160 = smul.addr %s159, 2
        %s161 = smul.addr %s160, 4
        %s162 = scalar_lea.vmem %s0, %s161
      $region28: #{patch_contrastive_forward.2} parent=23 // pred_fallthru
        _
      // Predicated region
      $region29: #{patch_contrastive_forward.2} parent=23 // pred_check
        %p163 = pneg %p56
      $region30: #{patch_contrastive_forward.2} parent=23 // pred_check_branch
        %165 = sbr.rel (%p163) target = $region32
      $region31: #{patch_contrastive_forward.2} parent=23 // pred_region
        %p166 = scmp.lt.s32.totalorder %s10, 1
        %s167 = scalar_select %p166, %s10, 1
        %s168 = smul.addr %s167, 6
        %s169 = smul.addr %s168, 4
        %s170 = scalar_lea.vmem %s1, %s169
      $region32: #{patch_contrastive_forward.2} parent=23 // pred_fallthru
        _
    $region24: #{patch_contrastive_forward.2} parent=5 // pred_fallthru
      _
    %p171 = scmp.le.s32.totalorder 1, %s10
    %p172 = scmp.lt.s32.totalorder %s10, 3
    %p173 = pnand %p171, %p172
    %p174 = pneg %p173
    // Predicated region
    $region33: #{patch_contrastive_forward.2} parent=5 // pred_check
      _
    $region34: #{patch_contrastive_forward.2} parent=5 // pred_check_branch
      %176 = sbr.rel (%p173) target = $region36
    $region35: #{patch_contrastive_forward.2} parent=5 // pred_region
      %s177 = ssub.s32 %s10, 1
      %p178 = scmp.lt.s32.totalorder %s15, 1
      %s179 = scalar_select %p178, %s15, 1
      %s180 = smul.addr %s179, 2
      %s181 = smul.addr %s180, 4
      %s182 = scalar_lea.vmem %s0, %s181
      %p183 = pneg %p36
      %p184 = pneg %p33
      %p185 = scmp.lt.s32.totalorder %s15, 1
      %s186 = scalar_select %p185, %s15, 1
      %s187 = smul.addr %s186, 6
      %s188 = smul.addr %s187, 4
      %s189 = scalar_lea.vmem %s1, %s188
      %p190 = pneg %p62
      %p191 = pneg %p59
      %p192 = pneg %p83
      %p193 = pneg %p80
      %p194 = pneg %p104
      %p195 = pneg %p101
      %p196 = pneg %p130
      %p197 = pneg %p127
      %p198 = scmp.lt.s32.totalorder %s15, 1
      %s199 = scalar_select %p198, %s15, 1
      %s200 = smul.addr %s199, 8
      %s201 = scalar_lea.vmem %s4, %s200
      %p202 = scmp.lt.s32.totalorder %s15, 1
      %s203 = scalar_select %p202, %s15, 1
      %s204 = smul.addr %s203, 2
      %s205 = smul.addr %s204, 4
      %s206 = scalar_lea.vmem %s0, %s205
      %p207 = scmp.lt.s32.totalorder %s15, 1
      %s208 = scalar_select %p207, %s15, 1
      %s209 = smul.addr %s208, 6
      %s210 = smul.addr %s209, 4
      %s211 = scalar_lea.vmem %s1, %s210
      %p212 = scmp.lt.s32.totalorder %s15, 1
      %s213 = scalar_select %p212, %s15, 1
      %s214 = smul.addr %s213, 8
      %s215 = scalar_lea.vmem %s4, %s214
      %v217 = vld [vmem:[%s206] sm:$0xff]
      %v218 = vunpack.c.l.bf16 %v217
      %v219 = vunpack.c.h.bf16 %v217
      %v220 = vsub.f32 %v218, 0.4
      %v221 = vsub.f32 %v219, 0.4
      %v222 = vmul.f32 %v220, -10000.0
      %v223 = vmul.f32 %v221, -10000.0
      %v224 = vmul.f32 %v222, 1.442695
      %v225 = vpow.pop %v224
      %v226 = vmul.f32 %v223, 1.442695
      %v227 = vpow.pop %v226
      %v228 = vadd.f32 %v225, 1.0
      %v229 = vadd.f32 %v227, 1.0
      %v230 = vrcp.pop %v228
      %v231 = vmul.f32 1.0, %v230
      %v232 = vrcp.pop %v229
      %v233 = vmul.f32 1.0, %v232
      %v234 = vld [vmem:[%s211] sm:$0xff]
      %v235 = vld [vmem:[%s211 + $0x8] sm:$0xff]
      %v236 = vld [vmem:[%s211 + $0x10] sm:$0xff]
      %v237 = vunpack.c.l.bf16 %v234
      %v238 = vunpack.c.h.bf16 %v234
      %v239 = vunpack.c.l.bf16 %v235
      %v240 = vunpack.c.h.bf16 %v235
      %v241 = vunpack.c.l.bf16 %v236
      %v242 = vunpack.c.h.bf16 %v236
      %v243 = vmul.f32 %v231, %v237
      %v244 = vmul.f32 %v233, %v238
      %v245 = vmul.f32 %v231, %v239
      %v246 = vmul.f32 %v233, %v240
      %v247 = vmul.f32 %v231, %v241
      %v248 = vmul.f32 %v233, %v242
      %v249 = vpack.c.bf16 %v243, %v243
      %v250 = vpack.c.bf16 %v244, %v244
      %v251 = vpack.c.bf16 %v245, %v245
      %v252 = vpack.c.bf16 %v246, %v246
      %v253 = vpack.c.bf16 %v247, %v247
      %v254 = vpack.c.bf16 %v248, %v248
      %v255 = vld [vmem:[%s2] sm:$0xf]
      %v256 = vld [vmem:[%s2 + $0x4] sm:$0xf]
      %v257 = vld [vmem:[%s2 + $0x8] sm:$0xf]
      %v258 = vld [vmem:[%s2 + $0xc] sm:$0xf]
      %v259 = vld [vmem:[%s2 + $0x10] sm:$0xf]
      %v260 = vld [vmem:[%s2 + $0x14] sm:$0xf]
      %v261 = vld [vmem:[%s2 + $0x18] sm:$0xf]
      %v262 = vld [vmem:[%s2 + $0x1c] sm:$0xf]
      %v263 = vld [vmem:[%s2 + $0x20] sm:$0xf]
      %v264 = vld [vmem:[%s2 + $0x24] sm:$0xf]
      %v265 = vld [vmem:[%s2 + $0x28] sm:$0xf]
      %v266 = vld [vmem:[%s2 + $0x2c] sm:$0xf]
      %v267 = vld [vmem:[%s2 + $0x30] sm:$0xf]
      %v268 = vld [vmem:[%s2 + $0x34] sm:$0xf]
      %v269 = vld [vmem:[%s2 + $0x38] sm:$0xf]
      %v270 = vld [vmem:[%s2 + $0x3c] sm:$0xf]
      %v271 = vld [vmem:[%s2 + $0x40] sm:$0xf]
      %v272 = vld [vmem:[%s2 + $0x44] sm:$0xf]
      %v273 = vld [vmem:[%s2 + $0x48] sm:$0xf]
      %v274 = vld [vmem:[%s2 + $0x4c] sm:$0xf]
      %v275 = vld [vmem:[%s2 + $0x50] sm:$0xf]
      %v276 = vld [vmem:[%s2 + $0x54] sm:$0xf]
      %v277 = vld [vmem:[%s2 + $0x58] sm:$0xf]
      %v278 = vld [vmem:[%s2 + $0x5c] sm:$0xf]
      %v279 = vld [vmem:[%s2 + $0x60] sm:$0xf]
      %v280 = vld [vmem:[%s2 + $0x64] sm:$0xf]
      %v281 = vld [vmem:[%s2 + $0x68] sm:$0xf]
      %v282 = vld [vmem:[%s2 + $0x6c] sm:$0xf]
      %v283 = vld [vmem:[%s2 + $0x70] sm:$0xf]
      %v284 = vld [vmem:[%s2 + $0x74] sm:$0xf]
      %v285 = vld [vmem:[%s2 + $0x78] sm:$0xf]
      %v286 = vld [vmem:[%s2 + $0x7c] sm:$0xf]
      %v287 = vld [vmem:[%s2 + $0x80] sm:$0xf]
      %v288 = vld [vmem:[%s2 + $0x84] sm:$0xf]
      %v289 = vld [vmem:[%s2 + $0x88] sm:$0xf]
      %v290 = vld [vmem:[%s2 + $0x8c] sm:$0xf]
      %v291 = vld [vmem:[%s2 + $0x90] sm:$0xf]
      %v292 = vld [vmem:[%s2 + $0x94] sm:$0xf]
      %v293 = vld [vmem:[%s2 + $0x98] sm:$0xf]
      %v294 = vld [vmem:[%s2 + $0x9c] sm:$0xf]
      %v295 = vld [vmem:[%s2 + $0xa0] sm:$0xf]
      %v296 = vld [vmem:[%s2 + $0xa4] sm:$0xf]
      %v297 = vld [vmem:[%s2 + $0xa8] sm:$0xf]
      %v298 = vld [vmem:[%s2 + $0xac] sm:$0xf]
      %v299 = vld [vmem:[%s2 + $0xb0] sm:$0xf]
      %v300 = vld [vmem:[%s2 + $0xb4] sm:$0xf]
      %v301 = vld [vmem:[%s2 + $0xb8] sm:$0xf]
      %v302 = vld [vmem:[%s2 + $0xbc] sm:$0xf]
      %v303 = vld [vmem:[%s2 + $0xc0] sm:$0xf]
      %v304 = vld [vmem:[%s2 + $0xc4] sm:$0xf]
      %v305 = vld [vmem:[%s2 + $0xc8] sm:$0xf]
      %v306 = vld [vmem:[%s2 + $0xcc] sm:$0xf]
      %v307 = vld [vmem:[%s2 + $0xd0] sm:$0xf]
      %v308 = vld [vmem:[%s2 + $0xd4] sm:$0xf]
      %v309 = vld [vmem:[%s2 + $0xd8] sm:$0xf]
      %v310 = vld [vmem:[%s2 + $0xdc] sm:$0xf]
      %v311 = vld [vmem:[%s2 + $0xe0] sm:$0xf]
      %v312 = vld [vmem:[%s2 + $0xe4] sm:$0xf]
      %v313 = vld [vmem:[%s2 + $0xe8] sm:$0xf]
      %v314 = vld [vmem:[%s2 + $0xec] sm:$0xf]
      %v315 = vld [vmem:[%s2 + $0xf0] sm:$0xf]
      %v316 = vld [vmem:[%s2 + $0xf4] sm:$0xf]
      %v317 = vld [vmem:[%s2 + $0xf8] sm:$0xf]
      %v318 = vld [vmem:[%s2 + $0xfc] sm:$0xf]
      %v319 = vld [vmem:[%s2 + $0x100] sm:$0xf]
      %v320 = vld [vmem:[%s2 + $0x104] sm:$0xf]
      %v321 = vld [vmem:[%s2 + $0x108] sm:$0xf]
      %v322 = vld [vmem:[%s2 + $0x10c] sm:$0xf]
      %v323 = vld [vmem:[%s2 + $0x110] sm:$0xf]
      %v324 = vld [vmem:[%s2 + $0x114] sm:$0xf]
      %v325 = vld [vmem:[%s2 + $0x118] sm:$0xf]
      %v326 = vld [vmem:[%s2 + $0x11c] sm:$0xf]
      %v327 = vld [vmem:[%s2 + $0x120] sm:$0xf]
      %v328 = vld [vmem:[%s2 + $0x124] sm:$0xf]
      %v329 = vld [vmem:[%s2 + $0x128] sm:$0xf]
      %v330 = vld [vmem:[%s2 + $0x12c] sm:$0xf]
      %v331 = vld [vmem:[%s2 + $0x130] sm:$0xf]
      %v332 = vld [vmem:[%s2 + $0x134] sm:$0xf]
      %v333 = vld [vmem:[%s2 + $0x138] sm:$0xf]
      %v334 = vld [vmem:[%s2 + $0x13c] sm:$0xf]
      %v335 = vld [vmem:[%s2 + $0x140] sm:$0xf]
      %v336 = vld [vmem:[%s2 + $0x144] sm:$0xf]
      %v337 = vld [vmem:[%s2 + $0x148] sm:$0xf]
      %v338 = vld [vmem:[%s2 + $0x14c] sm:$0xf]
      %v339 = vld [vmem:[%s2 + $0x150] sm:$0xf]
      %v340 = vld [vmem:[%s2 + $0x154] sm:$0xf]
      %v341 = vld [vmem:[%s2 + $0x158] sm:$0xf]
      %v342 = vld [vmem:[%s2 + $0x15c] sm:$0xf]
      %v343 = vld [vmem:[%s2 + $0x160] sm:$0xf]
      %v344 = vld [vmem:[%s2 + $0x164] sm:$0xf]
      %v345 = vld [vmem:[%s2 + $0x168] sm:$0xf]
      %v346 = vld [vmem:[%s2 + $0x16c] sm:$0xf]
      %v347 = vld [vmem:[%s2 + $0x170] sm:$0xf]
      %v348 = vld [vmem:[%s2 + $0x174] sm:$0xf]
      %v349 = vld [vmem:[%s2 + $0x178] sm:$0xf]
      %v350 = vld [vmem:[%s2 + $0x17c] sm:$0xf]
      %v351 = vld [vmem:[%s3] sm:$0x1]
      %v353 = vlaneseq
      %v354 = vshrl.u32 %v353, 7
      %v355 = vsub.s32 0, %v354
      %v356 = vrot.slane %v351, %v355
      %v454 = vunpack.c.l.b16 %v255
      %v455 = vunpack.c.l.b16 %v256
      %v456 = vunpack.c.l.b16 %v257
      %v457 = vunpack.c.l.b16 %v258
      %v458 = vunpack.c.l.b16 %v259
      %v459 = vunpack.c.l.b16 %v260
      %v460 = vunpack.c.l.b16 %v261
      %v461 = vunpack.c.l.b16 %v262
      %v462 = vunpack.c.l.b16 %v263
      %v463 = vunpack.c.l.b16 %v264
      %v464 = vunpack.c.l.b16 %v265
      %v465 = vunpack.c.l.b16 %v266
      %v466 = vunpack.c.l.b16 %v267
      %v467 = vunpack.c.l.b16 %v268
      %v468 = vunpack.c.l.b16 %v269
      %v469 = vunpack.c.l.b16 %v270
      %v470 = vunpack.c.l.b16 %v271
      %v471 = vunpack.c.l.b16 %v272
      %v472 = vunpack.c.l.b16 %v273
      %v473 = vunpack.c.l.b16 %v274
      %v474 = vunpack.c.l.b16 %v275
      %v475 = vunpack.c.l.b16 %v276
      %v476 = vunpack.c.l.b16 %v277
      %v477 = vunpack.c.l.b16 %v278
      %v478 = vunpack.c.l.b16 %v279
      %v479 = vunpack.c.l.b16 %v280
      %v480 = vunpack.c.l.b16 %v281
      %v481 = vunpack.c.l.b16 %v282
      %v482 = vunpack.c.l.b16 %v283
      %v483 = vunpack.c.l.b16 %v284
      %v484 = vunpack.c.l.b16 %v285
      %v485 = vunpack.c.l.b16 %v286
      %v486 = vunpack.c.l.b16 %v287
      %v487 = vunpack.c.l.b16 %v288
      %v488 = vunpack.c.l.b16 %v289
      %v489 = vunpack.c.l.b16 %v290
      %v490 = vunpack.c.l.b16 %v291
      %v491 = vunpack.c.l.b16 %v292
      %v492 = vunpack.c.l.b16 %v293
      %v493 = vunpack.c.l.b16 %v294
      %v494 = vunpack.c.l.b16 %v295
      %v495 = vunpack.c.l.b16 %v296
      %v496 = vunpack.c.l.b16 %v297
      %v497 = vunpack.c.l.b16 %v298
      %v498 = vunpack.c.l.b16 %v299
      %v499 = vunpack.c.l.b16 %v300
      %v500 = vunpack.c.l.b16 %v301
      %v501 = vunpack.c.l.b16 %v302
      %v502 = vunpack.c.l.b16 %v303
      %v503 = vunpack.c.l.b16 %v304
      %v504 = vunpack.c.l.b16 %v305
      %v505 = vunpack.c.l.b16 %v306
      %v506 = vunpack.c.l.b16 %v307
      %v507 = vunpack.c.l.b16 %v308
      %v508 = vunpack.c.l.b16 %v309
      %v509 = vunpack.c.l.b16 %v310
      %v510 = vunpack.c.l.b16 %v311
      %v511 = vunpack.c.l.b16 %v312
      %v512 = vunpack.c.l.b16 %v313
      %v513 = vunpack.c.l.b16 %v314
      %v514 = vunpack.c.l.b16 %v315
      %v515 = vunpack.c.l.b16 %v316
      %v516 = vunpack.c.l.b16 %v317
      %v517 = vunpack.c.l.b16 %v318
      %v518 = vunpack.c.l.b16 %v319
      %v519 = vunpack.c.l.b16 %v320
      %v520 = vunpack.c.l.b16 %v321
      %v521 = vunpack.c.l.b16 %v322
      %v522 = vunpack.c.l.b16 %v323
      %v523 = vunpack.c.l.b16 %v324
      %v524 = vunpack.c.l.b16 %v325
      %v525 = vunpack.c.l.b16 %v326
      %v526 = vunpack.c.l.b16 %v327
      %v527 = vunpack.c.l.b16 %v328
      %v528 = vunpack.c.l.b16 %v329
      %v529 = vunpack.c.l.b16 %v330
      %v530 = vunpack.c.l.b16 %v331
      %v531 = vunpack.c.l.b16 %v332
      %v532 = vunpack.c.l.b16 %v333
      %v533 = vunpack.c.l.b16 %v334
      %v534 = vunpack.c.l.b16 %v335
      %v535 = vunpack.c.l.b16 %v336
      %v536 = vunpack.c.l.b16 %v337
      %v537 = vunpack.c.l.b16 %v338
      %v538 = vunpack.c.l.b16 %v339
      %v539 = vunpack.c.l.b16 %v340
      %v540 = vunpack.c.l.b16 %v341
      %v541 = vunpack.c.l.b16 %v342
      %v542 = vunpack.c.l.b16 %v343
      %v543 = vunpack.c.l.b16 %v344
      %v544 = vunpack.c.l.b16 %v345
      %v545 = vunpack.c.l.b16 %v346
      %v546 = vunpack.c.l.b16 %v347
      %v547 = vunpack.c.l.b16 %v348
      %v548 = vunpack.c.l.b16 %v349
      %v549 = vunpack.c.l.b16 %v350
      %v550 = vpack.c.b16 %v455, %v454
      %v551 = vpack.c.b16 %v457, %v456
      %v552 = vpack.c.b16 %v459, %v458
      %v553 = vpack.c.b16 %v461, %v460
      %v554 = vpack.c.b16 %v463, %v462
      %v555 = vpack.c.b16 %v465, %v464
      %v556 = vpack.c.b16 %v467, %v466
      %v557 = vpack.c.b16 %v469, %v468
      %v558 = vpack.c.b16 %v471, %v470
      %v559 = vpack.c.b16 %v473, %v472
      %v560 = vpack.c.b16 %v475, %v474
      %v561 = vpack.c.b16 %v477, %v476
      %v562 = vpack.c.b16 %v479, %v478
      %v563 = vpack.c.b16 %v481, %v480
      %v564 = vpack.c.b16 %v483, %v482
      %v565 = vpack.c.b16 %v485, %v484
      %v566 = vpack.c.b16 %v487, %v486
      %v567 = vpack.c.b16 %v489, %v488
      %v568 = vpack.c.b16 %v491, %v490
      %v569 = vpack.c.b16 %v493, %v492
      %v570 = vpack.c.b16 %v495, %v494
      %v571 = vpack.c.b16 %v497, %v496
      %v572 = vpack.c.b16 %v499, %v498
      %v573 = vpack.c.b16 %v501, %v500
      %v574 = vpack.c.b16 %v503, %v502
      %v575 = vpack.c.b16 %v505, %v504
      %v576 = vpack.c.b16 %v507, %v506
      %v577 = vpack.c.b16 %v509, %v508
      %v578 = vpack.c.b16 %v511, %v510
      %v579 = vpack.c.b16 %v513, %v512
      %v580 = vpack.c.b16 %v515, %v514
      %v581 = vpack.c.b16 %v517, %v516
      %v582 = vpack.c.b16 %v519, %v518
      %v583 = vpack.c.b16 %v521, %v520
      %v584 = vpack.c.b16 %v523, %v522
      %v585 = vpack.c.b16 %v525, %v524
      %v586 = vpack.c.b16 %v527, %v526
      %v587 = vpack.c.b16 %v529, %v528
      %v588 = vpack.c.b16 %v531, %v530
      %v589 = vpack.c.b16 %v533, %v532
      %v590 = vpack.c.b16 %v535, %v534
      %v591 = vpack.c.b16 %v537, %v536
      %v592 = vpack.c.b16 %v539, %v538
      %v593 = vpack.c.b16 %v541, %v540
      %v594 = vpack.c.b16 %v543, %v542
      %v595 = vpack.c.b16 %v545, %v544
      %v596 = vpack.c.b16 %v547, %v546
      %v597 = vpack.c.b16 %v549, %v548
      %646 = vmatprep.subr.bf16.mxu0 0
      %647 = vmatpush1.bf16.msra.mxu0 %v557
      %648 = vmatprep.subr.bf16.mxu0 0
      %649 = vmatpush1.bf16.msra.mxu0 %v556
      %650 = vmatprep.subr.bf16.mxu0 0
      %651 = vmatpush1.bf16.msra.mxu0 %v555
      %652 = vmatprep.subr.bf16.mxu0 0
      %653 = vmatpush1.bf16.msra.mxu0 %v554
      %654 = vmatprep.subr.bf16.mxu0 0
      %655 = vmatpush1.bf16.msra.mxu0 %v553
      %656 = vmatprep.subr.bf16.mxu0 0
      %657 = vmatpush1.bf16.msra.mxu0 %v552
      %658 = vmatprep.subr.bf16.mxu0 0
      %659 = vmatpush1.bf16.msra.mxu0 %v551
      %660 = vmatprep.subr.bf16.mxu0 0
      %661 = vmatpush1.bf16.msra.mxu0 %v550
      %662 = vmatprep.subr.bf16.mxu0 0
      %663 = vmatpush2.bf16.msra.mxu0 %v565
      %664 = vmatprep.subr.bf16.mxu0 0
      %665 = vmatpush2.bf16.msra.mxu0 %v564
      %666 = vmatprep.subr.bf16.mxu0 0
      %667 = vmatpush2.bf16.msra.mxu0 %v563
      %668 = vmatprep.subr.bf16.mxu0 0
      %669 = vmatpush2.bf16.msra.mxu0 %v562
      %670 = vmatprep.subr.bf16.mxu0 0
      %671 = vmatpush2.bf16.msra.mxu0 %v561
      %672 = vmatprep.subr.bf16.mxu0 0
      %673 = vmatpush2.bf16.msra.mxu0 %v560
      %674 = vmatprep.subr.bf16.mxu0 0
      %675 = vmatpush2.bf16.msra.mxu0 %v559
      %676 = vmatprep.subr.bf16.mxu0 0
      %677 = vmatpush2.bf16.msra.mxu0 %v558
      %678 = vmatprep.mubr.bf16.mxu0 %v250
      %679 = vmatmul.mubr.bf16.gmra.mxu0 %v249
      %v680 = vpop.f32.mrf.mxu0
      %v681 = vadd.f32 %v356, %v680
      %v682 = vpop.f32.mrf.mxu0
      %v683 = vpop.f32.mrf.mxu0
      %v684 = vpop.f32.mrf.mxu0
      %685 = vdwg.mxu0
      %686 = vmatprep.subr.bf16.mxu0 0
      %687 = vmatpush1.bf16.msra.mxu0 %v573
      %688 = vmatprep.subr.bf16.mxu0 0
      %689 = vmatpush1.bf16.msra.mxu0 %v572
      %690 = vmatprep.subr.bf16.mxu0 0
      %691 = vmatpush1.bf16.msra.mxu0 %v571
      %692 = vmatprep.subr.bf16.mxu0 0
      %693 = vmatpush1.bf16.msra.mxu0 %v570
      %694 = vmatprep.subr.bf16.mxu0 0
      %695 = vmatpush1.bf16.msra.mxu0 %v569
      %696 = vmatprep.subr.bf16.mxu0 0
      %697 = vmatpush1.bf16.msra.mxu0 %v568
      %698 = vmatprep.subr.bf16.mxu0 0
      %699 = vmatpush1.bf16.msra.mxu0 %v567
      %700 = vmatprep.subr.bf16.mxu0 0
      %701 = vmatpush1.bf16.msra.mxu0 %v566
      %702 = vmatprep.subr.bf16.mxu0 0
      %703 = vmatpush2.bf16.msra.mxu0 %v581
      %704 = vmatprep.subr.bf16.mxu0 0
      %705 = vmatpush2.bf16.msra.mxu0 %v580
      %706 = vmatprep.subr.bf16.mxu0 0
      %707 = vmatpush2.bf16.msra.mxu0 %v579
      %708 = vmatprep.subr.bf16.mxu0 0
      %709 = vmatpush2.bf16.msra.mxu0 %v578
      %710 = vmatprep.subr.bf16.mxu0 0
      %711 = vmatpush2.bf16.msra.mxu0 %v577
      %712 = vmatprep.subr.bf16.mxu0 0
      %713 = vmatpush2.bf16.msra.mxu0 %v576
      %714 = vmatprep.subr.bf16.mxu0 0
      %715 = vmatpush2.bf16.msra.mxu0 %v575
      %716 = vmatprep.subr.bf16.mxu0 0
      %717 = vmatpush2.bf16.msra.mxu0 %v574
      %718 = vmatprep.mubr.bf16.mxu0 %v252
      %719 = vmatmul.mubr.bf16.gmra.mxu0 %v251
      %v720 = vpop.f32.mrf.mxu0
      %v721 = vadd.f32 %v681, %v720
      %v722 = vpop.f32.mrf.mxu0
      %v723 = vpop.f32.mrf.mxu0
      %v724 = vpop.f32.mrf.mxu0
      %725 = vdwg.mxu0
      %726 = vmatprep.subr.bf16.mxu0 0
      %727 = vmatpush1.bf16.msra.mxu0 %v589
      %728 = vmatprep.subr.bf16.mxu0 0
      %729 = vmatpush1.bf16.msra.mxu0 %v588
      %730 = vmatprep.subr.bf16.mxu0 0
      %731 = vmatpush1.bf16.msra.mxu0 %v587
      %732 = vmatprep.subr.bf16.mxu0 0
      %733 = vmatpush1.bf16.msra.mxu0 %v586
      %734 = vmatprep.subr.bf16.mxu0 0
      %735 = vmatpush1.bf16.msra.mxu0 %v585
      %736 = vmatprep.subr.bf16.mxu0 0
      %737 = vmatpush1.bf16.msra.mxu0 %v584
      %738 = vmatprep.subr.bf16.mxu0 0
      %739 = vmatpush1.bf16.msra.mxu0 %v583
      %740 = vmatprep.subr.bf16.mxu0 0
      %741 = vmatpush1.bf16.msra.mxu0 %v582
      %742 = vmatprep.subr.bf16.mxu0 0
      %743 = vmatpush2.bf16.msra.mxu0 %v597
      %744 = vmatprep.subr.bf16.mxu0 0
      %745 = vmatpush2.bf16.msra.mxu0 %v596
      %746 = vmatprep.subr.bf16.mxu0 0
      %747 = vmatpush2.bf16.msra.mxu0 %v595
      %748 = vmatprep.subr.bf16.mxu0 0
      %749 = vmatpush2.bf16.msra.mxu0 %v594
      %750 = vmatprep.subr.bf16.mxu0 0
      %751 = vmatpush2.bf16.msra.mxu0 %v593
      %752 = vmatprep.subr.bf16.mxu0 0
      %753 = vmatpush2.bf16.msra.mxu0 %v592
      %754 = vmatprep.subr.bf16.mxu0 0
      %755 = vmatpush2.bf16.msra.mxu0 %v591
      %756 = vmatprep.subr.bf16.mxu0 0
      %757 = vmatpush2.bf16.msra.mxu0 %v590
      %758 = vmatprep.mubr.bf16.mxu0 %v254
      %759 = vmatmul.mubr.bf16.gmra.mxu0 %v253
      %v760 = vpop.f32.mrf.mxu0
      %v761 = vadd.f32 %v721, %v760
      %v762 = vpop.f32.mrf.mxu0
      %v763 = vpop.f32.mrf.mxu0
      %v764 = vpop.f32.mrf.mxu0
      %765 = vdwg.mxu0
      %766 = vst [vmem:[%s215] sm:$0xff] %v761
      %p767 = scmp.lt.s32.totalorder %s15, 1
      %s768 = scalar_select %p767, %s15, 1
      %s769 = smul.addr %s768, 8
      %s770 = scalar_lea.vmem %s4, %s769
      // Predicated region
      $region37: #{patch_contrastive_forward.2} parent=35 // pred_check
        %p771 = pneg %p127
      $region38: #{patch_contrastive_forward.2} parent=35 // pred_check_branch
        %773 = sbr.rel (%p771) target = $region40
      $region39: #{patch_contrastive_forward.2} parent=35 // pred_region
        _
      $region40: #{patch_contrastive_forward.2} parent=35 // pred_fallthru
        _
    $region36: #{patch_contrastive_forward.2} parent=5 // pred_fallthru
      _
    %p774 = scmp.le.s32.totalorder 2, %s10
    // Predicated region
    $region41: #{patch_contrastive_forward.2} parent=5 // pred_check
      %p775 = pneg %p774
    $region42: #{patch_contrastive_forward.2} parent=5 // pred_check_branch
      %777 = sbr.rel (%p775) target = $region44
    $region43: #{patch_contrastive_forward.2} parent=5 // pred_region
      %s778 = ssub.s32 %s10, 2
      // Predicated region
      $region45: #{patch_contrastive_forward.2} parent=43 // pred_check
        %p779 = pneg %p133
      $region46: #{patch_contrastive_forward.2} parent=43 // pred_check_branch
        %781 = sbr.rel (%p779) target = $region48
      $region47: #{patch_contrastive_forward.2} parent=43 // pred_region
        %p782 = scmp.lt.s32.totalorder %s16, 1
        %s783 = scalar_select %p782, %s16, 1
        %s784 = smul.addr %s783, 8
        %s785 = scalar_lea.vmem %s4, %s784
      $region48: #{patch_contrastive_forward.2} parent=43 // pred_fallthru
        _
    $region44: #{patch_contrastive_forward.2} parent=5 // pred_fallthru
      _
  $region6: #{patch_contrastive_forward.2} parent=0 // loop_footer
    %s14 = sadd.s32 1, %s10
  $region7: #{patch_contrastive_forward.2} parent=0 // loop_footer_branch
    %9 = sbr.rel target = $region3
  $region8: #{patch_contrastive_forward.2} parent=0 // loop_exit
    _

</llo_original>
